<compile_context>
chip_gen: v7x
topology: tpu7x:2x2x1
jax: 0.10.0
libtpu: 0.0.40
codegen_flags: <defaults>
</compile_context>

<pallas_src>
import functools

import jax
import jax.numpy as jnp
import numpy as np
from jax.experimental import pallas as pl
from jax.experimental.pallas import tpu as pltpu

LAMBDA1, LAMBDA2, LAMBDA3 = 1.0, 3.0, 0.3


def _loss_kernel(n_rows, tile, inner_tiles,
                 pred_ref, tb_ref, bpred_ref, dpred_ref, dtarget_ref, bw_ref,
                 out_ref,
                 seg_acc, bnum_acc, bden_acc, dir_acc):
    s = pl.program_id(0)   # shard axis (per-TensorCore split on dual-TC chips)
    j = pl.program_id(1)   # row-tile axis within the shard (reduction)

    @pl.when(j == 0)
    def _():
        seg_acc[...] = jnp.zeros_like(seg_acc)
        bnum_acc[...] = jnp.zeros_like(bnum_acc)
        bden_acc[...] = jnp.zeros_like(bden_acc)
        dir_acc[...] = jnp.zeros_like(dir_acc)

    c = seg_acc.shape[1]
    cb = bnum_acc.shape[1]

    row0 = (s * inner_tiles + j) * tile          # logical (unclamped) first row of this step
    in_range = row0 < n_rows                     # block contains at least one valid row
    full = (row0 + tile) <= n_rows               # block contains only valid rows

    def accumulate(mask_rows):
        pred = pred_ref[...].astype(jnp.float32)            # (tile, C)   upcast in-register
        bpred = bpred_ref[...].astype(jnp.float32)          # (tile, Cb)
        bw = bw_ref[...].astype(jnp.float32)                # (1, Cb)     resident
        tb = tb_ref[...]                                    # (tile, 2)   int32 (merged targets)
        tgt = tb[:, 0:1]                                    # (tile, 1)
        btgt = tb[:, 1:2]                                   # (tile, 1)

        cls = jax.lax.broadcasted_iota(jnp.int32, (tile, c), 1)
        bcls = jax.lax.broadcasted_iota(jnp.int32, (tile, cb), 1)
        hit = cls == tgt
        bhit = bcls == btgt
        if mask_rows:
            row_ids = row0 + jax.lax.broadcasted_iota(jnp.int32, (tile, 1), 0)
            valid = row_ids < n_rows
            hit = hit & valid
            bhit = bhit & valid

        # seg nll partials: sum_i pred[i, t_i]   (negated once in the wrapper epilogue)
        seg_acc[...] += jnp.sum(jnp.where(hit, pred, 0.0), axis=0, keepdims=True)

        # weighted boundary nll partials: num_i = w[t_i]*bpred[i,t_i] ; den_i = w[t_i]
        wsel = jnp.where(bhit, bw, 0.0)
        if mask_rows:
            # keep the where-select AFTER the multiply so garbage rows past the end of the
            # array cannot leak NaN/inf through a 0*NaN product.
            bnum_c = jnp.where(bhit, bw * bpred, 0.0)
        else:
            bnum_c = wsel * bpred
        bnum_acc[...] += jnp.sum(bnum_c, axis=0, keepdims=True)
        bden_acc[...] += jnp.sum(wsel, axis=0, keepdims=True)

        # mse partials over the lane-dense direction slab; the slab is explicitly zero-padded
        # past n_rows*dd in the wrapper, so no per-row masking is ever needed here.
        d = dpred_ref[...].astype(jnp.float32) - dtarget_ref[...].astype(jnp.float32)
        dir_acc[...] += jnp.sum(d * d, axis=0, keepdims=True)

    # Fast unmasked path for interior tiles; masked path only for the final partial tile.
    # Steps whose logical block is entirely past the end (clamped re-reads) accumulate nothing.
    @pl.when(full)
    def _():
        accumulate(False)

    @pl.when(jnp.logical_and(in_range, jnp.logical_not(full)))
    def _():
        accumulate(True)

    # Last step of this shard: cross-lane reduce once, pack into a lane-dense (8,128) block.
    @pl.when(j == inner_tiles - 1)
    def _():
        seg_sum = jnp.sum(seg_acc[...])
        bnum = jnp.sum(bnum_acc[...])
        bden = jnp.sum(bden_acc[...])
        dsum = jnp.sum(dir_acc[...])
        lane = jax.lax.broadcasted_iota(jnp.int32, (8, 128), 1)
        sub = jax.lax.broadcasted_iota(jnp.int32, (8, 128), 0)
        r0 = sub == 0
        out_ref[...] = (jnp.where(r0 & (lane == 0), seg_sum, 0.0)
                        + jnp.where(r0 & (lane == 1), bnum, 0.0)
                        + jnp.where(r0 & (lane == 2), bden, 0.0)
                        + jnp.where(r0 & (lane == 3), dsum, 0.0))


def _device_kind():
    try:
        return jax.devices()[0].device_kind.lower()
    except Exception:
        return ""


def get_loss_pallas(pred, bpred, dpred, target, btarget, dtarget,
                    trans_feat, weight, bweights, *, tile=None, num_shards=None):
    # trans_feat and weight are unused by the reference forward pass (signature parity).
    del trans_feat, weight

    n, c = pred.shape
    nb, cb = bpred.shape
    nd, dd = dpred.shape
    assert nb == n and nd == n, "pred/bpred/dpred must have the same number of rows"
    assert dtarget.shape == dpred.shape

    kind = _device_kind()
    is_multi_tc = ("v7" in kind) or ("7x" in kind)   # dual-TensorCore generation

    if tile is None:
        tile = 2048                                  # big tile on every generation
    if num_shards is None:
        num_shards = 2 if is_multi_tc else 1         # shard axis is pure overhead on 1-TC chips

    # Sublane-align and never exceed the rounded-up row count (keeps blocks <= array dims).
    tile = max(8, (tile // 8) * 8)
    tile = min(tile, ((n + 7) // 8) * 8)

    num_row_blocks = pl.cdiv(n, tile)
    num_shards = max(1, min(num_shards, num_row_blocks))
    inner_tiles = pl.cdiv(num_row_blocks, num_shards)
    last_block = num_row_blocks - 1

    # ---- wrapper-side input prep (cheap / mostly metadata) -------------------------------
    # Merge the two integer target columns into one (N, 2) stream: one DMA instead of two.
    tb = jnp.concatenate([target.reshape(n, 1).astype(jnp.int32),
                          btarget.reshape(n, 1).astype(jnp.int32)], axis=1)
    bw2 = bweights.reshape(1, cb)

    # Lane-densify the MSE stream: flatten (N, dd) -> zero-pad -> (num_row_blocks*mr, 128),
    # one (mr, 128) lane-dense block per row tile.  The MSE sum is order-agnostic and the
    # padding is zero in both operands, so it contributes nothing.
    mr = -(-(tile * dd) // 128)      # ceil(tile*dd / 128)
    mr = -(-mr // 8) * 8             # round up to a multiple of 8 sublanes
    per_blk = mr * 128

    def to_slab(x):
        flat = x.reshape(-1)
        pad = num_row_blocks * tile * dd - flat.shape[0]
        if pad:
            flat = jnp.pad(flat, (0, pad))
        blk = flat.reshape(num_row_blocks, tile * dd)
        if per_blk != tile * dd:
            blk = jnp.pad(blk, ((0, 0), (0, per_blk - tile * dd)))
        return blk.reshape(num_row_blocks * mr, 128)

    dpred_slab = to_slab(dpred)
    dtarget_slab = to_slab(dtarget)

    def row_map(s_, j_):
        # Clamp so an over-provisioned trailing shard re-reads a valid block; those steps are
        # skipped in-kernel (row0 >= n), so nothing is double counted.
        return (jnp.minimum(s_ * inner_tiles + j_, last_block), 0)

    kernel = functools.partial(_loss_kernel, n, tile, inner_tiles)

    # Shard axis: CORE_PARALLEL guarantees the per-TensorCore split on dual-TC chips; plain
    # "parallel" elsewhere (on 1-TC chips it is just a serial loop of length 1).
    shard_sem = pltpu.CORE_PARALLEL if (is_multi_tc and num_shards > 1) else "parallel"

    partials = pl.pallas_call(
        kernel,
        out_shape=jax.ShapeDtypeStruct((num_shards * 8, 128), jnp.float32),
        grid_spec=pltpu.PrefetchScalarGridSpec(
            num_scalar_prefetch=0,
            grid=(num_shards, inner_tiles),
            in_specs=[
                pl.BlockSpec((tile, c), row_map),               # pred       (native dtype)
                pl.BlockSpec((tile, 2), row_map),               # targets    (merged int32)
                pl.BlockSpec((tile, cb), row_map),              # bpred      (native dtype)
                pl.BlockSpec((mr, 128), row_map),               # dpred slab (lane dense)
                pl.BlockSpec((mr, 128), row_map),               # dtarget slab
                pl.BlockSpec((1, cb), lambda s_, j_: (0, 0)),   # bweights   (resident)
            ],
            out_specs=pl.BlockSpec((8, 128), lambda s_, j_: (s_, 0)),
            scratch_shapes=[
                pltpu.VMEM((1, c), jnp.float32),     # seg partial sums (per class lane)
                pltpu.VMEM((1, cb), jnp.float32),    # boundary numerator partials
                pltpu.VMEM((1, cb), jnp.float32),    # boundary denominator partials
                pltpu.VMEM((1, 128), jnp.float32),   # mse partials (per lane)
            ],
        ),
        compiler_params=pltpu.CompilerParams(
            dimension_semantics=(shard_sem, "arbitrary"),
            vmem_limit_bytes=32 * 1024 * 1024,
        ),
    )(pred, tb, bpred, dpred_slab, dtarget_slab, bw2)

    # Tiny scalar epilogue: combine per-shard partial sums; negations folded out of the loop.
    sums = jnp.sum(partials, axis=0)                 # (128,)
    seg = -sums[0] / n
    bnd = -sums[1] / sums[2]
    dl = sums[3] / (n * dd)
    total = LAMBDA1 * seg + LAMBDA2 * bnd + LAMBDA3 * dl
    return total, seg, bnd, dl


def _reference(pred, bpred, dpred, target, btarget, dtarget, bweights):
    # pure-JAX reference (mirrors torch F.nll_loss / F.mse_loss), computed in f32
    pred = pred.astype(jnp.float32)
    bpred = bpred.astype(jnp.float32)
    dpred = dpred.astype(jnp.float32)
    dtarget = dtarget.astype(jnp.float32)
    bweights = bweights.astype(jnp.float32)
    seg = -jnp.mean(jnp.take_along_axis(pred, target[:, None], axis=1))
    w = bweights[btarget]
    picked = jnp.take_along_axis(bpred, btarget[:, None], axis=1)[:, 0]
    bnd = -jnp.sum(w * picked) / jnp.sum(w)
    dl = jnp.mean((dpred - dtarget) ** 2)
    total = LAMBDA1 * seg + LAMBDA2 * bnd + LAMBDA3 * dl
    return total, seg, bnd, dl


if __name__ == "__main__":
    key = jax.random.PRNGKey(0)
    B, PTS = 2, 128
    N = B * PTS            # flattened B*points rows
    NUM_CLASSES = 13       # semantic classes
    NUM_BCLASSES = 2       # boundary / non-boundary
    DIR_DIM = 3            # direction vector dim

    k1, k2, k3, k4, k5, k6, k7 = jax.random.split(key, 7)
    pred = jax.nn.log_softmax(jax.random.normal(k1, (N, NUM_CLASSES), jnp.float32), axis=-1)
    bpred = jax.nn.log_softmax(jax.random.normal(k2, (N, NUM_BCLASSES), jnp.float32), axis=-1)
    dpred = jax.random.normal(k3, (N, DIR_DIM), jnp.float32)
    target = jax.random.randint(k4, (N,), 0, NUM_CLASSES, jnp.int32)
    btarget = jax.random.randint(k5, (N,), 0, NUM_BCLASSES, jnp.int32)
    dtarget = jax.random.normal(k6, (N, DIR_DIM), jnp.float32)
    bweights = jnp.abs(jax.random.normal(k7, (NUM_BCLASSES,), jnp.float32)) + 0.5
    trans_feat = None      # unused by the reference forward
    weight = None          # unused by the reference forward

    ref = _reference(pred, bpred, dpred, target, btarget, dtarget, bweights)

    # Default path: tile clamped to the row count -> single exact block, fast unmasked path.
    result = get_loss_pallas(pred, bpred, dpred, target, btarget, dtarget,
                             trans_feat, weight, bweights)
    result = jax.block_until_ready(result)
    for got, want in zip(result, ref):
        np.testing.assert_allclose(np.asarray(got), np.asarray(want), rtol=1e-5, atol=1e-5)

    # Tiny tile + forced two shards: exercises multi-tile accumulation, the masked partial
    # tail block, the clamped/skipped trailing step and the per-block-padded MSE slab
    # (cdiv(256, 96) = 3 row blocks over a 2x2 grid).
    result_small = get_loss_pallas(pred, bpred, dpred, target, btarget, dtarget,
                                   trans_feat, weight, bweights, tile=96, num_shards=2)
    result_small = jax.block_until_ready(result_small)
    for got, want in zip(result_small, ref):
        np.testing.assert_allclose(np.asarray(got), np.asarray(want), rtol=1e-5, atol=1e-5)

    print("KERNEL_OK")
</pallas_src>

<mosaic_0001>
module attributes {stable_mosaic.version = 11 : i64} {
  func.func @_loss_kernel(%arg0: i32, %arg1: i32, %arg2: memref<256x13xf32, #tpu.memory_space<vmem>>, %arg3: memref<256x2xi32, #tpu.memory_space<vmem>>, %arg4: memref<256x2xf32, #tpu.memory_space<vmem>>, %arg5: memref<8x128xf32, #tpu.memory_space<vmem>>, %arg6: memref<8x128xf32, #tpu.memory_space<vmem>>, %arg7: memref<1x2xf32, #tpu.memory_space<vmem>>, %arg8: memref<8x128xf32, #tpu.memory_space<vmem>>, %arg9: memref<1x13xf32, #tpu.memory_space<vmem>>, %arg10: memref<1x2xf32, #tpu.memory_space<vmem>>, %arg11: memref<1x2xf32, #tpu.memory_space<vmem>>, %arg12: memref<1x128xf32, #tpu.memory_space<vmem>>) attributes {dimension_semantics = [#tpu.dimension_semantics<parallel>, #tpu.dimension_semantics<arbitrary>], iteration_bounds = array<i64: 1, 1>, scalar_prefetch = 0 : i64, scratch_operands = 4 : i64, tpu.core_type = #tpu.core_type<tc>, window_params = [{transform_indices = @transform_0, window_bounds = array<i64: 256, 13>}, {transform_indices = @transform_1, window_bounds = array<i64: 256, 2>}, {transform_indices = @transform_2, window_bounds = array<i64: 256, 2>}, {transform_indices = @transform_3, window_bounds = array<i64: 8, 128>}, {transform_indices = @transform_4, window_bounds = array<i64: 8, 128>}, {pipeline_mode = #tpu.pipeline_mode<synchronous>, transform_indices = @transform_5, window_bounds = array<i64: 1, 2>}, {transform_indices = @transform_6, window_bounds = array<i64: 8, 128>}]} {
    %c0_i32 = arith.constant 0 : i32
    %0 = arith.cmpi eq, %arg1, %c0_i32 : i32
    %1 = arith.extui %0 : i1 to i32
    %c0_i32_0 = arith.constant 0 : i32
    %2 = arith.cmpi ne, %1, %c0_i32_0 : i32
    scf.if %2 {
      %cst = arith.constant 0.000000e+00 : f32
      %18 = vector.broadcast %cst : f32 to vector<1x13xf32>
      %c0 = arith.constant 0 : index
      %c0_8 = arith.constant 0 : index
      %19 = vector.load %arg9[%c0, %c0_8] : memref<1x13xf32, #tpu.memory_space<vmem>>, vector<1x13xf32>
      tpu.vector_store %arg9[%c0, %c0_8], %18 {strides = array<i32>} : memref<1x13xf32, #tpu.memory_space<vmem>>, vector<1x13xf32>,
      %cst_9 = arith.constant 0.000000e+00 : f32
      %20 = vector.broadcast %cst_9 : f32 to vector<1x2xf32>
      %c0_10 = arith.constant 0 : index
      %c0_11 = arith.constant 0 : index
      %21 = vector.load %arg10[%c0_10, %c0_11] : memref<1x2xf32, #tpu.memory_space<vmem>>, vector<1x2xf32>
      tpu.vector_store %arg10[%c0_10, %c0_11], %20 {strides = array<i32>} : memref<1x2xf32, #tpu.memory_space<vmem>>, vector<1x2xf32>,
      %cst_12 = arith.constant 0.000000e+00 : f32
      %22 = vector.broadcast %cst_12 : f32 to vector<1x2xf32>
      %c0_13 = arith.constant 0 : index
      %c0_14 = arith.constant 0 : index
      %23 = vector.load %arg11[%c0_13, %c0_14] : memref<1x2xf32, #tpu.memory_space<vmem>>, vector<1x2xf32>
      tpu.vector_store %arg11[%c0_13, %c0_14], %22 {strides = array<i32>} : memref<1x2xf32, #tpu.memory_space<vmem>>, vector<1x2xf32>,
      %cst_15 = arith.constant 0.000000e+00 : f32
      %24 = vector.broadcast %cst_15 : f32 to vector<1x128xf32>
      %c0_16 = arith.constant 0 : index
      %c0_17 = arith.constant 0 : index
      %25 = vector.load %arg12[%c0_16, %c0_17] : memref<1x128xf32, #tpu.memory_space<vmem>>, vector<1x128xf32>
      tpu.vector_store %arg12[%c0_16, %c0_17], %24 {strides = array<i32>} : memref<1x128xf32, #tpu.memory_space<vmem>>, vector<1x128xf32>,
    } else {
    }
    %c1_i32 = arith.constant 1 : i32
    %3 = arith.muli %arg0, %c1_i32 : i32
    %4 = arith.addi %3, %arg1 : i32
    %c256_i32 = arith.constant 256 : i32
    %5 = arith.muli %4, %c256_i32 : i32
    %c256_i32_1 = arith.constant 256 : i32
    %6 = arith.cmpi slt, %5, %c256_i32_1 : i32
    %c256_i32_2 = arith.constant 256 : i32
    %7 = arith.addi %5, %c256_i32_2 : i32
    %c256_i32_3 = arith.constant 256 : i32
    %8 = arith.cmpi sle, %7, %c256_i32_3 : i32
    %9 = arith.extui %8 : i1 to i32
    %c0_i32_4 = arith.constant 0 : i32
    %10 = arith.cmpi ne, %9, %c0_i32_4 : i32
    scf.if %10 {
      %c0 = arith.constant 0 : index
      %c0_8 = arith.constant 0 : index
      %18 = vector.load %arg2[%c0, %c0_8] : memref<256x13xf32, #tpu.memory_space<vmem>>, vector<256x13xf32>
      %c0_9 = arith.constant 0 : index
      %c0_10 = arith.constant 0 : index
      %19 = vector.load %arg4[%c0_9, %c0_10] : memref<256x2xf32, #tpu.memory_space<vmem>>, vector<256x2xf32>
      %c0_11 = arith.constant 0 : index
      %c0_12 = arith.constant 0 : index
      %20 = vector.load %arg7[%c0_11, %c0_12] : memref<1x2xf32, #tpu.memory_space<vmem>>, vector<1x2xf32>
      %c0_13 = arith.constant 0 : index
      %c0_14 = arith.constant 0 : index
      %21 = vector.load %arg3[%c0_13, %c0_14] : memref<256x2xi32, #tpu.memory_space<vmem>>, vector<256x2xi32>
      %22 = vector.extract_strided_slice %21 {offsets = [0, 0], sizes = [256, 1], strides = [1, 1]} : vector<256x2xi32> to vector<256x1xi32>
      %23 = vector.extract_strided_slice %21 {offsets = [0, 1], sizes = [256, 1], strides = [1, 1]} : vector<256x2xi32> to vector<256x1xi32>
      %24 = tpu.iota {dimensions = array<i32: 1>} : vector<256x13xi32>
      %25 = tpu.iota {dimensions = array<i32: 1>} : vector<256x2xi32>
      %26 = vector.broadcast %22 : vector<256x1xi32> to vector<256x13xi32>
      %27 = arith.cmpi eq, %24, %26 : vector<256x13xi32>
      %28 = vector.broadcast %23 : vector<256x1xi32> to vector<256x2xi32>
      %29 = arith.cmpi eq, %25, %28 : vector<256x2xi32>
      %c0_15 = arith.constant 0 : index
      %c0_16 = arith.constant 0 : index
      %30 = vector.load %arg9[%c0_15, %c0_16] : memref<1x13xf32, #tpu.memory_space<vmem>>, vector<1x13xf32>
      %cst = arith.constant 0.000000e+00 : f32
      %31 = vector.broadcast %cst : f32 to vector<256x13xf32>
      %32 = arith.select %27, %18, %31 : vector<256x13xi1>, vector<256x13xf32>
      %cst_17 = arith.constant dense<0.000000e+00> : vector<13xf32>
      %33 = vector.multi_reduction <add>, %32, %cst_17 [0] : vector<256x13xf32> to vector<13xf32>
      %34 = vector.shape_cast %33 : vector<13xf32> to vector<1x13xf32>
      %35 = arith.addf %30, %34 : vector<1x13xf32>
      %c0_18 = arith.constant 0 : index
      %c0_19 = arith.constant 0 : index
      %36 = vector.load %arg9[%c0_18, %c0_19] : memref<1x13xf32, #tpu.memory_space<vmem>>, vector<1x13xf32>
      tpu.vector_store %arg9[%c0_18, %c0_19], %35 {strides = array<i32>} : memref<1x13xf32, #tpu.memory_space<vmem>>, vector<1x13xf32>,
      %cst_20 = arith.constant 0.000000e+00 : f32
      %37 = vector.shape_cast %20 : vector<1x2xf32> to vector<1x2xf32>
      %38 = vector.broadcast %37 : vector<1x2xf32> to vector<256x2xf32>
      %39 = vector.broadcast %cst_20 : f32 to vector<256x2xf32>
      %40 = arith.select %29, %38, %39 : vector<256x2xi1>, vector<256x2xf32>
      %41 = arith.mulf %40, %19 : vector<256x2xf32>
      %c0_21 = arith.constant 0 : index
      %c0_22 = arith.constant 0 : index
      %42 = vector.load %arg10[%c0_21, %c0_22] : memref<1x2xf32, #tpu.memory_space<vmem>>, vector<1x2xf32>
      %cst_23 = arith.constant dense<0.000000e+00> : vector<2xf32>
      %43 = vector.multi_reduction <add>, %41, %cst_23 [0] : vector<256x2xf32> to vector<2xf32>
      %44 = vector.shape_cast %43 : vector<2xf32> to vector<1x2xf32>
      %45 = arith.addf %42, %44 : vector<1x2xf32>
      %c0_24 = arith.constant 0 : index
      %c0_25 = arith.constant 0 : index
      %46 = vector.load %arg10[%c0_24, %c0_25] : memref<1x2xf32, #tpu.memory_space<vmem>>, vector<1x2xf32>
      tpu.vector_store %arg10[%c0_24, %c0_25], %45 {strides = array<i32>} : memref<1x2xf32, #tpu.memory_space<vmem>>, vector<1x2xf32>,
      %c0_26 = arith.constant 0 : index
      %c0_27 = arith.constant 0 : index
      %47 = vector.load %arg11[%c0_26, %c0_27] : memref<1x2xf32, #tpu.memory_space<vmem>>, vector<1x2xf32>
      %cst_28 = arith.constant dense<0.000000e+00> : vector<2xf32>
      %48 = vector.multi_reduction <add>, %40, %cst_28 [0] : vector<256x2xf32> to vector<2xf32>
      %49 = vector.shape_cast %48 : vector<2xf32> to vector<1x2xf32>
      %50 = arith.addf %47, %49 : vector<1x2xf32>
      %c0_29 = arith.constant 0 : index
      %c0_30 = arith.constant 0 : index
      %51 = vector.load %arg11[%c0_29, %c0_30] : memref<1x2xf32, #tpu.memory_space<vmem>>, vector<1x2xf32>
      tpu.vector_store %arg11[%c0_29, %c0_30], %50 {strides = array<i32>} : memref<1x2xf32, #tpu.memory_space<vmem>>, vector<1x2xf32>,
      %c0_31 = arith.constant 0 : index
      %c0_32 = arith.constant 0 : index
      %52 = vector.load %arg5[%c0_31, %c0_32] : memref<8x128xf32, #tpu.memory_space<vmem>>, vector<8x128xf32>
      %c0_33 = arith.constant 0 : index
      %c0_34 = arith.constant 0 : index
      %53 = vector.load %arg6[%c0_33, %c0_34] : memref<8x128xf32, #tpu.memory_space<vmem>>, vector<8x128xf32>
      %54 = arith.subf %52, %53 : vector<8x128xf32>
      %c0_35 = arith.constant 0 : index
      %c0_36 = arith.constant 0 : index
      %55 = vector.load %arg12[%c0_35, %c0_36] : memref<1x128xf32, #tpu.memory_space<vmem>>, vector<1x128xf32>
      %56 = arith.mulf %54, %54 : vector<8x128xf32>
      %cst_37 = arith.constant dense<0.000000e+00> : vector<128xf32>
      %57 = vector.multi_reduction <add>, %56, %cst_37 [0] : vector<8x128xf32> to vector<128xf32>
      %58 = vector.shape_cast %57 : vector<128xf32> to vector<1x128xf32>
      %59 = arith.addf %55, %58 : vector<1x128xf32>
      %c0_38 = arith.constant 0 : index
      %c0_39 = arith.constant 0 : index
      %60 = vector.load %arg12[%c0_38, %c0_39] : memref<1x128xf32, #tpu.memory_space<vmem>>, vector<1x128xf32>
      tpu.vector_store %arg12[%c0_38, %c0_39], %59 {strides = array<i32>} : memref<1x128xf32, #tpu.memory_space<vmem>>, vector<1x128xf32>,
    } else {
    }
    %true = arith.constant true
    %11 = arith.xori %8, %true : i1
    %12 = arith.andi %6, %11 : i1
    %13 = arith.extui %12 : i1 to i32
    %c0_i32_5 = arith.constant 0 : i32
    %14 = arith.cmpi ne, %13, %c0_i32_5 : i32
    scf.if %14 {
      %c0 = arith.constant 0 : index
      %c0_8 = arith.constant 0 : index
      %18 = vector.load %arg2[%c0, %c0_8] : memref<256x13xf32, #tpu.memory_space<vmem>>, vector<256x13xf32>
      %c0_9 = arith.constant 0 : index
      %c0_10 = arith.constant 0 : index
      %19 = vector.load %arg4[%c0_9, %c0_10] : memref<256x2xf32, #tpu.memory_space<vmem>>, vector<256x2xf32>
      %c0_11 = arith.constant 0 : index
      %c0_12 = arith.constant 0 : index
      %20 = vector.load %arg7[%c0_11, %c0_12] : memref<1x2xf32, #tpu.memory_space<vmem>>, vector<1x2xf32>
      %c0_13 = arith.constant 0 : index
      %c0_14 = arith.constant 0 : index
      %21 = vector.load %arg3[%c0_13, %c0_14] : memref<256x2xi32, #tpu.memory_space<vmem>>, vector<256x2xi32>
      %22 = vector.extract_strided_slice %21 {offsets = [0, 0], sizes = [256, 1], strides = [1, 1]} : vector<256x2xi32> to vector<256x1xi32>
      %23 = vector.extract_strided_slice %21 {offsets = [0, 1], sizes = [256, 1], strides = [1, 1]} : vector<256x2xi32> to vector<256x1xi32>
      %24 = tpu.iota {dimensions = array<i32: 1>} : vector<256x13xi32>
      %25 = tpu.iota {dimensions = array<i32: 1>} : vector<256x2xi32>
      %26 = vector.broadcast %22 : vector<256x1xi32> to vector<256x13xi32>
      %27 = arith.cmpi eq, %24, %26 : vector<256x13xi32>
      %28 = vector.broadcast %23 : vector<256x1xi32> to vector<256x2xi32>
      %29 = arith.cmpi eq, %25, %28 : vector<256x2xi32>
      %30 = tpu.iota {dimensions = array<i32: 0>} : vector<256x1xi32>
      %31 = vector.broadcast %5 : i32 to vector<256x1xi32>
      %32 = arith.addi %31, %30 : vector<256x1xi32>
      %c256_i32_15 = arith.constant 256 : i32
      %33 = vector.broadcast %c256_i32_15 : i32 to vector<256x1xi32>
      %34 = arith.cmpi slt, %32, %33 : vector<256x1xi32>
      %35 = vector.broadcast %34 : vector<256x1xi1> to vector<256x13xi1>
      %36 = arith.andi %27, %35 : vector<256x13xi1>
      %37 = vector.broadcast %34 : vector<256x1xi1> to vector<256x2xi1>
      %38 = arith.andi %29, %37 : vector<256x2xi1>
      %c0_16 = arith.constant 0 : index
      %c0_17 = arith.constant 0 : index
      %39 = vector.load %arg9[%c0_16, %c0_17] : memref<1x13xf32, #tpu.memory_space<vmem>>, vector<1x13xf32>
      %cst = arith.constant 0.000000e+00 : f32
      %40 = vector.broadcast %cst : f32 to vector<256x13xf32>
      %41 = arith.select %36, %18, %40 : vector<256x13xi1>, vector<256x13xf32>
      %cst_18 = arith.constant dense<0.000000e+00> : vector<13xf32>
      %42 = vector.multi_reduction <add>, %41, %cst_18 [0] : vector<256x13xf32> to vector<13xf32>
      %43 = vector.shape_cast %42 : vector<13xf32> to vector<1x13xf32>
      %44 = arith.addf %39, %43 : vector<1x13xf32>
      %c0_19 = arith.constant 0 : index
      %c0_20 = arith.constant 0 : index
      %45 = vector.load %arg9[%c0_19, %c0_20] : memref<1x13xf32, #tpu.memory_space<vmem>>, vector<1x13xf32>
      tpu.vector_store %arg9[%c0_19, %c0_20], %44 {strides = array<i32>} : memref<1x13xf32, #tpu.memory_space<vmem>>, vector<1x13xf32>,
      %cst_21 = arith.constant 0.000000e+00 : f32
      %46 = vector.shape_cast %20 : vector<1x2xf32> to vector<1x2xf32>
      %47 = vector.broadcast %46 : vector<1x2xf32> to vector<256x2xf32>
      %48 = vector.broadcast %cst_21 : f32 to vector<256x2xf32>
      %49 = arith.select %38, %47, %48 : vector<256x2xi1>, vector<256x2xf32>
      %50 = vector.broadcast %20 : vector<1x2xf32> to vector<256x2xf32>
      %51 = arith.mulf %50, %19 : vector<256x2xf32>
      %cst_22 = arith.constant 0.000000e+00 : f32
      %52 = vector.broadcast %cst_22 : f32 to vector<256x2xf32>
      %53 = arith.select %38, %51, %52 : vector<256x2xi1>, vector<256x2xf32>
      %c0_23 = arith.constant 0 : index
      %c0_24 = arith.constant 0 : index
      %54 = vector.load %arg10[%c0_23, %c0_24] : memref<1x2xf32, #tpu.memory_space<vmem>>, vector<1x2xf32>
      %cst_25 = arith.constant dense<0.000000e+00> : vector<2xf32>
      %55 = vector.multi_reduction <add>, %53, %cst_25 [0] : vector<256x2xf32> to vector<2xf32>
      %56 = vector.shape_cast %55 : vector<2xf32> to vector<1x2xf32>
      %57 = arith.addf %54, %56 : vector<1x2xf32>
      %c0_26 = arith.constant 0 : index
      %c0_27 = arith.constant 0 : index
      %58 = vector.load %arg10[%c0_26, %c0_27] : memref<1x2xf32, #tpu.memory_space<vmem>>, vector<1x2xf32>
      tpu.vector_store %arg10[%c0_26, %c0_27], %57 {strides = array<i32>} : memref<1x2xf32, #tpu.memory_space<vmem>>, vector<1x2xf32>,
      %c0_28 = arith.constant 0 : index
      %c0_29 = arith.constant 0 : index
      %59 = vector.load %arg11[%c0_28, %c0_29] : memref<1x2xf32, #tpu.memory_space<vmem>>, vector<1x2xf32>
      %cst_30 = arith.constant dense<0.000000e+00> : vector<2xf32>
      %60 = vector.multi_reduction <add>, %49, %cst_30 [0] : vector<256x2xf32> to vector<2xf32>
      %61 = vector.shape_cast %60 : vector<2xf32> to vector<1x2xf32>
      %62 = arith.addf %59, %61 : vector<1x2xf32>
      %c0_31 = arith.constant 0 : index
      %c0_32 = arith.constant 0 : index
      %63 = vector.load %arg11[%c0_31, %c0_32] : memref<1x2xf32, #tpu.memory_space<vmem>>, vector<1x2xf32>
      tpu.vector_store %arg11[%c0_31, %c0_32], %62 {strides = array<i32>} : memref<1x2xf32, #tpu.memory_space<vmem>>, vector<1x2xf32>,
      %c0_33 = arith.constant 0 : index
      %c0_34 = arith.constant 0 : index
      %64 = vector.load %arg5[%c0_33, %c0_34] : memref<8x128xf32, #tpu.memory_space<vmem>>, vector<8x128xf32>
      %c0_35 = arith.constant 0 : index
      %c0_36 = arith.constant 0 : index
      %65 = vector.load %arg6[%c0_35, %c0_36] : memref<8x128xf32, #tpu.memory_space<vmem>>, vector<8x128xf32>
      %66 = arith.subf %64, %65 : vector<8x128xf32>
      %c0_37 = arith.constant 0 : index
      %c0_38 = arith.constant 0 : index
      %67 = vector.load %arg12[%c0_37, %c0_38] : memref<1x128xf32, #tpu.memory_space<vmem>>, vector<1x128xf32>
      %68 = arith.mulf %66, %66 : vector<8x128xf32>
      %cst_39 = arith.constant dense<0.000000e+00> : vector<128xf32>
      %69 = vector.multi_reduction <add>, %68, %cst_39 [0] : vector<8x128xf32> to vector<128xf32>
      %70 = vector.shape_cast %69 : vector<128xf32> to vector<1x128xf32>
      %71 = arith.addf %67, %70 : vector<1x128xf32>
      %c0_40 = arith.constant 0 : index
      %c0_41 = arith.constant 0 : index
      %72 = vector.load %arg12[%c0_40, %c0_41] : memref<1x128xf32, #tpu.memory_space<vmem>>, vector<1x128xf32>
      tpu.vector_store %arg12[%c0_40, %c0_41], %71 {strides = array<i32>} : memref<1x128xf32, #tpu.memory_space<vmem>>, vector<1x128xf32>,
    } else {
    }
    %c0_i32_6 = arith.constant 0 : i32
    %15 = arith.cmpi eq, %arg1, %c0_i32_6 : i32
    %16 = arith.extui %15 : i1 to i32
    %c0_i32_7 = arith.constant 0 : i32
    %17 = arith.cmpi ne, %16, %c0_i32_7 : i32
    scf.if %17 {
      %c0 = arith.constant 0 : index
      %c0_8 = arith.constant 0 : index
      %18 = vector.load %arg9[%c0, %c0_8] : memref<1x13xf32, #tpu.memory_space<vmem>>, vector<1x13xf32>
      %19 = vector.shape_cast %18 : vector<1x13xf32> to vector<1x1x13xf32>
      %cst = arith.constant dense<0.000000e+00> : vector<1xf32>
      %20 = vector.multi_reduction <add>, %19, %cst [1, 2] : vector<1x1x13xf32> to vector<1xf32>
      %21 = vector.shape_cast %20 : vector<1xf32> to vector<1x1x1xf32>
      %22 = vector.extract %21[0, 0, 0] : f32 from vector<1x1x1xf32>
      %c0_9 = arith.constant 0 : index
      %c0_10 = arith.constant 0 : index
      %23 = vector.load %arg10[%c0_9, %c0_10] : memref<1x2xf32, #tpu.memory_space<vmem>>, vector<1x2xf32>
      %24 = vector.shape_cast %23 : vector<1x2xf32> to vector<1x1x2xf32>
      %cst_11 = arith.constant dense<0.000000e+00> : vector<1xf32>
      %25 = vector.multi_reduction <add>, %24, %cst_11 [1, 2] : vector<1x1x2xf32> to vector<1xf32>
      %26 = vector.shape_cast %25 : vector<1xf32> to vector<1x1x1xf32>
      %27 = vector.extract %26[0, 0, 0] : f32 from vector<1x1x1xf32>
      %c0_12 = arith.constant 0 : index
      %c0_13 = arith.constant 0 : index
      %28 = vector.load %arg11[%c0_12, %c0_13] : memref<1x2xf32, #tpu.memory_space<vmem>>, vector<1x2xf32>
      %29 = vector.shape_cast %28 : vector<1x2xf32> to vector<1x1x2xf32>
      %cst_14 = arith.constant dense<0.000000e+00> : vector<1xf32>
      %30 = vector.multi_reduction <add>, %29, %cst_14 [1, 2] : vector<1x1x2xf32> to vector<1xf32>
      %31 = vector.shape_cast %30 : vector<1xf32> to vector<1x1x1xf32>
      %32 = vector.extract %31[0, 0, 0] : f32 from vector<1x1x1xf32>
      %c0_15 = arith.constant 0 : index
      %c0_16 = arith.constant 0 : index
      %33 = vector.load %arg12[%c0_15, %c0_16] : memref<1x128xf32, #tpu.memory_space<vmem>>, vector<1x128xf32>
      %34 = vector.shape_cast %33 : vector<1x128xf32> to vector<1x1x128xf32>
      %cst_17 = arith.constant dense<0.000000e+00> : vector<1xf32>
      %35 = vector.multi_reduction <add>, %34, %cst_17 [1, 2] : vector<1x1x128xf32> to vector<1xf32>
      %36 = vector.shape_cast %35 : vector<1xf32> to vector<1x1x1xf32>
      %37 = vector.extract %36[0, 0, 0] : f32 from vector<1x1x1xf32>
      %38 = tpu.iota {dimensions = array<i32: 1>} : vector<8x128xi32>
      %39 = tpu.iota {dimensions = array<i32: 0>} : vector<8x128xi32>
      %c0_i32_18 = arith.constant 0 : i32
      %40 = vector.broadcast %c0_i32_18 : i32 to vector<8x128xi32>
      %41 = arith.cmpi eq, %39, %40 : vector<8x128xi32>
      %c0_i32_19 = arith.constant 0 : i32
      %42 = vector.broadcast %c0_i32_19 : i32 to vector<8x128xi32>
      %43 = arith.cmpi eq, %38, %42 : vector<8x128xi32>
      %44 = arith.andi %41, %43 : vector<8x128xi1>
      %cst_20 = arith.constant 0.000000e+00 : f32
      %45 = vector.broadcast %22 : f32 to vector<8x128xf32>
      %46 = vector.broadcast %cst_20 : f32 to vector<8x128xf32>
      %47 = arith.select %44, %45, %46 : vector<8x128xi1>, vector<8x128xf32>
      %c1_i32_21 = arith.constant 1 : i32
      %48 = vector.broadcast %c1_i32_21 : i32 to vector<8x128xi32>
      %49 = arith.cmpi eq, %38, %48 : vector<8x128xi32>
      %50 = arith.andi %41, %49 : vector<8x128xi1>
      %cst_22 = arith.constant 0.000000e+00 : f32
      %51 = vector.broadcast %27 : f32 to vector<8x128xf32>
      %52 = vector.broadcast %cst_22 : f32 to vector<8x128xf32>
      %53 = arith.select %50, %51, %52 : vector<8x128xi1>, vector<8x128xf32>
      %54 = arith.addf %47, %53 : vector<8x128xf32>
      %c2_i32 = arith.constant 2 : i32
      %55 = vector.broadcast %c2_i32 : i32 to vector<8x128xi32>
      %56 = arith.cmpi eq, %38, %55 : vector<8x128xi32>
      %57 = arith.andi %41, %56 : vector<8x128xi1>
      %cst_23 = arith.constant 0.000000e+00 : f32
      %58 = vector.broadcast %32 : f32 to vector<8x128xf32>
      %59 = vector.broadcast %cst_23 : f32 to vector<8x128xf32>
      %60 = arith.select %57, %58, %59 : vector<8x128xi1>, vector<8x128xf32>
      %61 = arith.addf %54, %60 : vector<8x128xf32>
      %c3_i32 = arith.constant 3 : i32
      %62 = vector.broadcast %c3_i32 : i32 to vector<8x128xi32>
      %63 = arith.cmpi eq, %38, %62 : vector<8x128xi32>
      %64 = arith.andi %41, %63 : vector<8x128xi1>
      %cst_24 = arith.constant 0.000000e+00 : f32
      %65 = vector.broadcast %37 : f32 to vector<8x128xf32>
      %66 = vector.broadcast %cst_24 : f32 to vector<8x128xf32>
      %67 = arith.select %64, %65, %66 : vector<8x128xi1>, vector<8x128xf32>
      %68 = arith.addf %61, %67 : vector<8x128xf32>
      %c0_25 = arith.constant 0 : index
      %c0_26 = arith.constant 0 : index
      %69 = vector.load %arg8[%c0_25, %c0_26] : memref<8x128xf32, #tpu.memory_space<vmem>>, vector<8x128xf32>
      tpu.vector_store %arg8[%c0_25, %c0_26], %68 {strides = array<i32>} : memref<8x128xf32, #tpu.memory_space<vmem>>, vector<8x128xf32>,
    } else {
    }
    return
  }
  func.func @transform_0(%arg0: i32, %arg1: i32) -> (i32, i32) {
    %c1_i32 = arith.constant 1 : i32
    %0 = arith.muli %arg0, %c1_i32 : i32
    %1 = arith.addi %0, %arg1 : i32
    %c0_i32 = arith.constant 0 : i32
    %2 = arith.minsi %1, %c0_i32 : i32
    %c0_i32_0 = arith.constant 0 : i32
    %c0_i32_1 = arith.constant 0 : i32
    return %2, %c0_i32_0 : i32, i32
  }
  func.func @transform_1(%arg0: i32, %arg1: i32) -> (i32, i32) {
    %c1_i32 = arith.constant 1 : i32
    %0 = arith.muli %arg0, %c1_i32 : i32
    %1 = arith.addi %0, %arg1 : i32
    %c0_i32 = arith.constant 0 : i32
    %2 = arith.minsi %1, %c0_i32 : i32
    %c0_i32_0 = arith.constant 0 : i32
    %c0_i32_1 = arith.constant 0 : i32
    return %2, %c0_i32_0 : i32, i32
  }
  func.func @transform_2(%arg0: i32, %arg1: i32) -> (i32, i32) {
    %c1_i32 = arith.constant 1 : i32
    %0 = arith.muli %arg0, %c1_i32 : i32
    %1 = arith.addi %0, %arg1 : i32
    %c0_i32 = arith.constant 0 : i32
    %2 = arith.minsi %1, %c0_i32 : i32
    %c0_i32_0 = arith.constant 0 : i32
    %c0_i32_1 = arith.constant 0 : i32
    return %2, %c0_i32_0 : i32, i32
  }
  func.func @transform_3(%arg0: i32, %arg1: i32) -> (i32, i32) {
    %c1_i32 = arith.constant 1 : i32
    %0 = arith.muli %arg0, %c1_i32 : i32
    %1 = arith.addi %0, %arg1 : i32
    %c0_i32 = arith.constant 0 : i32
    %2 = arith.minsi %1, %c0_i32 : i32
    %c0_i32_0 = arith.constant 0 : i32
    %c0_i32_1 = arith.constant 0 : i32
    return %2, %c0_i32_0 : i32, i32
  }
  func.func @transform_4(%arg0: i32, %arg1: i32) -> (i32, i32) {
    %c1_i32 = arith.constant 1 : i32
    %0 = arith.muli %arg0, %c1_i32 : i32
    %1 = arith.addi %0, %arg1 : i32
    %c0_i32 = arith.constant 0 : i32
    %2 = arith.minsi %1, %c0_i32 : i32
    %c0_i32_0 = arith.constant 0 : i32
    %c0_i32_1 = arith.constant 0 : i32
    return %2, %c0_i32_0 : i32, i32
  }
  func.func @transform_5(%arg0: i32, %arg1: i32) -> (i32, i32) {
    %c0_i32 = arith.constant 0 : i32
    %c0_i32_0 = arith.constant 0 : i32
    %c0_i32_1 = arith.constant 0 : i32
    return %c0_i32, %c0_i32_0 : i32, i32
  }
  func.func @transform_6(%arg0: i32, %arg1: i32) -> (i32, i32) {
    %c0_i32 = arith.constant 0 : i32
    %c0_i32_0 = arith.constant 0 : i32
    return %arg0, %c0_i32 : i32, i32
  }
}

</mosaic_0001>

<llo_original>
// kernel: tpu_custom_call.1
$region0: #{tpu_custom_call.1}
  #allocation0 [shape = 'u32[]', space=smem, size = 0x4, offset = 0x4, fixed_abs, tag = 'smem constant byte address 0x4 - core index']
  #allocation1 [shape = 'u32[144,128]{1,0:T(1,128)}', space=vmem, size = 0x12000, scoped, tag = 'internal scratch']
  #allocation2 [shape = 'f32[1,13]{1,0:T(1,128)}', space=vmem, size = 0x200, scoped, tag = 'scratch operand']
  #allocation3 [shape = 'f32[1,2]{1,0:T(1,128)}', space=vmem, size = 0x200, scoped, tag = 'scratch operand']
  #allocation4 [shape = 'f32[1,2]{1,0:T(1,128)}', space=vmem, size = 0x200, scoped, tag = 'scratch operand']
  #allocation5 [shape = 'f32[1,128]{1,0:T(1,128)}', space=vmem, size = 0x200, scoped, tag = 'scratch operand']
  %s0 = inlined_call_operand.vmem [shape: f32[256,13], index: 0, kind: input, shape index: {}]
  %s1 = inlined_call_operand.vmem [shape: s32[256,2], index: 1, kind: input, shape index: {}]
  %s2 = inlined_call_operand.vmem [shape: f32[256,2], index: 2, kind: input, shape index: {}]
  %s3 = inlined_call_operand.vmem [shape: f32[8,128], index: 3, kind: input, shape index: {}]
  %s4 = inlined_call_operand.vmem [shape: f32[8,128], index: 4, kind: input, shape index: {}]
  %s5 = inlined_call_operand.vmem [shape: f32[1,2], index: 5, kind: input, shape index: {}]
  %s6 = inlined_call_operand.hbm [shape: f32[8,128], index: 6, kind: output, shape index: {}]
  %s7 = sld [smem:[#allocation0]]
  $region50: #{tpu_custom_call.1} parent=0
    _
  %s9 = ssub.s32 1, %s7
  %s10 = scalar_select 0, %s9, %s7
  $region1: #{tpu_custom_call.1} parent=0
    #allocation6 [shape = 'u8[4096]{0}', space=vmem, size = 0x1000, scoped, tag = 'output window, operand 0, single buffered']
    #allocation7 [shape = 's32[1]{0}', space=sflag, size = 0x4, scoped, tag = 'scoped memory for tpu_custom_call.1']
    %11 = vsyncpa [#allocation7], 0
    // Predicated region
    $region2: #{tpu_custom_call.1} parent=1 // pred_check
      _
    $region3: #{tpu_custom_call.1} parent=1 // pred_check_branch
      %13 = sbr.rel (0) target = $region5
    $region4: #{tpu_custom_call.1} parent=1 // pred_region
      %s14 = sadd.s32 0, 0
      %p15 = scmp.lt.s32.totalorder %s14, 0
      %s16 = scalar_select %p15, %s14, 0
      %s17 = smul.u32 32, %s16
      %p18 = scmp.lt.s32.totalorder %s17, 31
      %s19 = scalar_select %p18, %s17, 31
      %s20 = smul.addr %s19, 8
      %s21 = scalar_lea.vmem %s0, %s20
      %s22 = sadd.s32 0, 0
      %p23 = scmp.lt.s32.totalorder %s22, 0
      %s24 = scalar_select %p23, %s22, 0
      %s25 = smul.u32 32, %s24
    $region5: #{tpu_custom_call.1} parent=1 // pred_fallthru
      _
    // Predicated region
    $region6: #{tpu_custom_call.1} parent=1 // pred_check
      _
    $region7: #{tpu_custom_call.1} parent=1 // pred_check_branch
      %27 = sbr.rel (0) target = $region9
    $region8: #{tpu_custom_call.1} parent=1 // pred_region
      %s28 = sadd.s32 0, 0
      %p29 = scmp.lt.s32.totalorder %s28, 0
      %s30 = scalar_select %p29, %s28, 0
      %s31 = smul.u32 32, %s30
      %p32 = scmp.lt.s32.totalorder %s31, 31
      %s33 = scalar_select %p32, %s31, 31
      %s34 = smul.addr %s33, 8
      %s35 = scalar_lea.vmem %s1, %s34
      %s36 = sadd.s32 0, 0
      %p37 = scmp.lt.s32.totalorder %s36, 0
      %s38 = scalar_select %p37, %s36, 0
      %s39 = smul.u32 32, %s38
    $region9: #{tpu_custom_call.1} parent=1 // pred_fallthru
      _
    // Predicated region
    $region10: #{tpu_custom_call.1} parent=1 // pred_check
      _
    $region11: #{tpu_custom_call.1} parent=1 // pred_check_branch
      %41 = sbr.rel (0) target = $region13
    $region12: #{tpu_custom_call.1} parent=1 // pred_region
      %s42 = sadd.s32 0, 0
      %p43 = scmp.lt.s32.totalorder %s42, 0
      %s44 = scalar_select %p43, %s42, 0
      %s45 = smul.u32 32, %s44
      %p46 = scmp.lt.s32.totalorder %s45, 31
      %s47 = scalar_select %p46, %s45, 31
      %s48 = smul.addr %s47, 8
      %s49 = scalar_lea.vmem %s2, %s48
      %s50 = sadd.s32 0, 0
      %p51 = scmp.lt.s32.totalorder %s50, 0
      %s52 = scalar_select %p51, %s50, 0
      %s53 = smul.u32 32, %s52
    $region13: #{tpu_custom_call.1} parent=1 // pred_fallthru
      _
    // Predicated region
    $region14: #{tpu_custom_call.1} parent=1 // pred_check
      _
    $region15: #{tpu_custom_call.1} parent=1 // pred_check_branch
      %55 = sbr.rel (0) target = $region17
    $region16: #{tpu_custom_call.1} parent=1 // pred_region
      %s56 = sadd.s32 0, 0
      %p57 = scmp.lt.s32.totalorder %s56, 0
      %s58 = scalar_select %p57, %s56, 0
      %p59 = scmp.lt.s32.totalorder %s58, 0
      %s60 = scalar_select %p59, %s58, 0
      %s61 = smul.addr %s60, 8
      %s62 = scalar_lea.vmem %s3, %s61
      %s63 = sadd.s32 0, 0
      %p64 = scmp.lt.s32.totalorder %s63, 0
      %s65 = scalar_select %p64, %s63, 0
    $region17: #{tpu_custom_call.1} parent=1 // pred_fallthru
      _
    // Predicated region
    $region18: #{tpu_custom_call.1} parent=1 // pred_check
      _
    $region19: #{tpu_custom_call.1} parent=1 // pred_check_branch
      %67 = sbr.rel (0) target = $region21
    $region20: #{tpu_custom_call.1} parent=1 // pred_region
      %s68 = sadd.s32 0, 0
      %p69 = scmp.lt.s32.totalorder %s68, 0
      %s70 = scalar_select %p69, %s68, 0
      %p71 = scmp.lt.s32.totalorder %s70, 0
      %s72 = scalar_select %p71, %s70, 0
      %s73 = smul.addr %s72, 8
      %s74 = scalar_lea.vmem %s4, %s73
      %s75 = sadd.s32 0, 0
      %p76 = scmp.lt.s32.totalorder %s75, 0
      %s77 = scalar_select %p76, %s75, 0
    $region21: #{tpu_custom_call.1} parent=1 // pred_fallthru
      _
    // Predicated region
    $region22: #{tpu_custom_call.1} parent=1 // pred_check
      _
    $region23: #{tpu_custom_call.1} parent=1 // pred_check_branch
      %79 = sbr.rel (0) target = $region25
    $region24: #{tpu_custom_call.1} parent=1 // pred_region
      _
    $region25: #{tpu_custom_call.1} parent=1 // pred_fallthru
      _
    %s80 = sadd.s32 0, 0
    %p81 = scmp.lt.s32.totalorder %s80, 0
    %s82 = scalar_select %p81, %s80, 0
    %s83 = smul.u32 32, %s82
    %p84 = scmp.lt.s32.totalorder %s83, 31
    %s85 = scalar_select %p84, %s83, 31
    %s86 = smul.addr %s85, 8
    %s87 = scalar_lea.vmem %s0, %s86
    %s88 = sadd.s32 0, 0
    %p89 = scmp.lt.s32.totalorder %s88, 0
    %s90 = scalar_select %p89, %s88, 0
    %s91 = smul.u32 32, %s90
    %p92 = scmp.lt.s32.totalorder %s91, 31
    %s93 = scalar_select %p92, %s91, 31
    %s94 = smul.addr %s93, 8
    %s95 = scalar_lea.vmem %s1, %s94
    %s96 = sadd.s32 0, 0
    %p97 = scmp.lt.s32.totalorder %s96, 0
    %s98 = scalar_select %p97, %s96, 0
    %s99 = smul.u32 32, %s98
    %p100 = scmp.lt.s32.totalorder %s99, 31
    %s101 = scalar_select %p100, %s99, 31
    %s102 = smul.addr %s101, 8
    %s103 = scalar_lea.vmem %s2, %s102
    %s104 = sadd.s32 0, 0
    %p105 = scmp.lt.s32.totalorder %s104, 0
    %s106 = scalar_select %p105, %s104, 0
    %p107 = scmp.lt.s32.totalorder %s106, 0
    %s108 = scalar_select %p107, %s106, 0
    %s109 = smul.addr %s108, 8
    %s110 = scalar_lea.vmem %s3, %s109
    %s111 = sadd.s32 0, 0
    %p112 = scmp.lt.s32.totalorder %s111, 0
    %s113 = scalar_select %p112, %s111, 0
    %p114 = scmp.lt.s32.totalorder %s113, 0
    %s115 = scalar_select %p114, %s113, 0
    %s116 = smul.addr %s115, 8
    %s117 = scalar_lea.vmem %s4, %s116
    %s118 = sadd.s32 0, 0
    %p119 = scmp.lt.s32.totalorder %s118, 0
    %s120 = scalar_select %p119, %s118, 0
    %s121 = smul.u32 32, %s120
    %p122 = scmp.lt.s32.totalorder %s121, 31
    %s123 = scalar_select %p122, %s121, 31
    %s124 = smul.addr %s123, 8
    %s125 = scalar_lea.vmem %s0, %s124
    %s126 = sadd.s32 0, 0
    %p127 = scmp.lt.s32.totalorder %s126, 0
    %s128 = scalar_select %p127, %s126, 0
    %s129 = smul.u32 32, %s128
    %s130 = sadd.s32 0, 0
    %p131 = scmp.lt.s32.totalorder %s130, 0
    %s132 = scalar_select %p131, %s130, 0
    %s133 = smul.u32 32, %s132
    %p134 = scmp.lt.s32.totalorder %s133, 31
    %s135 = scalar_select %p134, %s133, 31
    %s136 = smul.addr %s135, 8
    %s137 = scalar_lea.vmem %s1, %s136
    %s138 = sadd.s32 0, 0
    %p139 = scmp.lt.s32.totalorder %s138, 0
    %s140 = scalar_select %p139, %s138, 0
    %s141 = smul.u32 32, %s140
    %s142 = sadd.s32 0, 0
    %p143 = scmp.lt.s32.totalorder %s142, 0
    %s144 = scalar_select %p143, %s142, 0
    %s145 = smul.u32 32, %s144
    %p146 = scmp.lt.s32.totalorder %s145, 31
    %s147 = scalar_select %p146, %s145, 31
    %s148 = smul.addr %s147, 8
    %s149 = scalar_lea.vmem %s2, %s148
    %s150 = sadd.s32 0, 0
    %p151 = scmp.lt.s32.totalorder %s150, 0
    %s152 = scalar_select %p151, %s150, 0
    %s153 = smul.u32 32, %s152
    %s154 = sadd.s32 0, 0
    %p155 = scmp.lt.s32.totalorder %s154, 0
    %s156 = scalar_select %p155, %s154, 0
    %p157 = scmp.lt.s32.totalorder %s156, 0
    %s158 = scalar_select %p157, %s156, 0
    %s159 = smul.addr %s158, 8
    %s160 = scalar_lea.vmem %s3, %s159
    %s161 = sadd.s32 0, 0
    %p162 = scmp.lt.s32.totalorder %s161, 0
    %s163 = scalar_select %p162, %s161, 0
    %s164 = sadd.s32 0, 0
    %p165 = scmp.lt.s32.totalorder %s164, 0
    %s166 = scalar_select %p165, %s164, 0
    %p167 = scmp.lt.s32.totalorder %s166, 0
    %s168 = scalar_select %p167, %s166, 0
    %s169 = smul.addr %s168, 8
    %s170 = scalar_lea.vmem %s4, %s169
    %s171 = sadd.s32 0, 0
    %p172 = scmp.lt.s32.totalorder %s171, 0
    %s173 = scalar_select %p172, %s171, 0
    %p174 = scmp.eq.s32.totalorder 0, 0
    // Predicated region
    $region26: #{tpu_custom_call.1} parent=1 // pred_check
      %p175 = pneg %p174
    $region27: #{tpu_custom_call.1} parent=1 // pred_check_branch
      %177 = sbr.rel (%p175) target = $region29
    $region28: #{tpu_custom_call.1} parent=1 // pred_region
      %vm178 = vcmask 98304
      %179 = vst.msk [vmem:[#allocation2] sm:$0x1] %vm178, 0.0
      %vm180 = vcmask 8192
      %181 = vst.msk [vmem:[#allocation3] sm:$0x1] %vm180, 0.0
      %182 = vst.msk [vmem:[#allocation4] sm:$0x1] %vm180, 0.0
      %183 = vst [vmem:[#allocation5] sm:$0x1] 0.0
    $region29: #{tpu_custom_call.1} parent=1 // pred_fallthru
      _
    %s184 = sadd.s32 0, 0
    %s185 = smul.u32 %s184, 256
    %p186 = scmp.lt.s32.totalorder %s185, 256
    %s187 = sadd.s32 %s185, 256
    %p188 = scmp.le.s32.totalorder %s187, 256
    // Predicated region
    $region30: #{tpu_custom_call.1} parent=1 // pred_check
      %p189 = pneg %p188
    $region31: #{tpu_custom_call.1} parent=1 // pred_check_branch
      %191 = sbr.rel (%p189) target = $region33
    $region32: #{tpu_custom_call.1} parent=1 // pred_region
      %v192 = vld [vmem:[%s125] sm:$0xff]
      %v193 = vld [vmem:[%s125 + $0x8] sm:$0xff]
      %v194 = vld [vmem:[%s125 + $0x10] sm:$0xff]
      %v195 = vld [vmem:[%s125 + $0x18] sm:$0xff]
      %v196 = vld [vmem:[%s125 + $0x20] sm:$0xff]
      %v197 = vld [vmem:[%s125 + $0x28] sm:$0xff]
      %v198 = vld [vmem:[%s125 + $0x30] sm:$0xff]
      %v199 = vld [vmem:[%s125 + $0x38] sm:$0xff]
      %v200 = vld [vmem:[%s125 + $0x40] sm:$0xff]
      %v201 = vld [vmem:[%s125 + $0x48] sm:$0xff]
      %v202 = vld [vmem:[%s125 + $0x50] sm:$0xff]
      %v203 = vld [vmem:[%s125 + $0x58] sm:$0xff]
      %v204 = vld [vmem:[%s125 + $0x60] sm:$0xff]
      %v205 = vld [vmem:[%s125 + $0x68] sm:$0xff]
      %v206 = vld [vmem:[%s125 + $0x70] sm:$0xff]
      %v207 = vld [vmem:[%s125 + $0x78] sm:$0xff]
      %v208 = vld [vmem:[%s125 + $0x80] sm:$0xff]
      %v209 = vld [vmem:[%s125 + $0x88] sm:$0xff]
      %v210 = vld [vmem:[%s125 + $0x90] sm:$0xff]
      %v211 = vld [vmem:[%s125 + $0x98] sm:$0xff]
      %v212 = vld [vmem:[%s125 + $0xa0] sm:$0xff]
      %v213 = vld [vmem:[%s125 + $0xa8] sm:$0xff]
      %v214 = vld [vmem:[%s125 + $0xb0] sm:$0xff]
      %v215 = vld [vmem:[%s125 + $0xb8] sm:$0xff]
      %v216 = vld [vmem:[%s125 + $0xc0] sm:$0xff]
      %v217 = vld [vmem:[%s125 + $0xc8] sm:$0xff]
      %v218 = vld [vmem:[%s125 + $0xd0] sm:$0xff]
      %v219 = vld [vmem:[%s125 + $0xd8] sm:$0xff]
      %v220 = vld [vmem:[%s125 + $0xe0] sm:$0xff]
      %v221 = vld [vmem:[%s125 + $0xe8] sm:$0xff]
      %v222 = vld [vmem:[%s125 + $0xf0] sm:$0xff]
      %v223 = vld [vmem:[%s125 + $0xf8] sm:$0xff]
      %v224 = vld [vmem:[%s149] sm:$0xff]
      %v225 = vld [vmem:[%s149 + $0x8] sm:$0xff]
      %v226 = vld [vmem:[%s149 + $0x10] sm:$0xff]
      %v227 = vld [vmem:[%s149 + $0x18] sm:$0xff]
      %v228 = vld [vmem:[%s149 + $0x20] sm:$0xff]
      %v229 = vld [vmem:[%s149 + $0x28] sm:$0xff]
      %v230 = vld [vmem:[%s149 + $0x30] sm:$0xff]
      %v231 = vld [vmem:[%s149 + $0x38] sm:$0xff]
      %v232 = vld [vmem:[%s149 + $0x40] sm:$0xff]
      %v233 = vld [vmem:[%s149 + $0x48] sm:$0xff]
      %v234 = vld [vmem:[%s149 + $0x50] sm:$0xff]
      %v235 = vld [vmem:[%s149 + $0x58] sm:$0xff]
      %v236 = vld [vmem:[%s149 + $0x60] sm:$0xff]
      %v237 = vld [vmem:[%s149 + $0x68] sm:$0xff]
      %v238 = vld [vmem:[%s149 + $0x70] sm:$0xff]
      %v239 = vld [vmem:[%s149 + $0x78] sm:$0xff]
      %v240 = vld [vmem:[%s149 + $0x80] sm:$0xff]
      %v241 = vld [vmem:[%s149 + $0x88] sm:$0xff]
      %v242 = vld [vmem:[%s149 + $0x90] sm:$0xff]
      %v243 = vld [vmem:[%s149 + $0x98] sm:$0xff]
      %v244 = vld [vmem:[%s149 + $0xa0] sm:$0xff]
      %v245 = vld [vmem:[%s149 + $0xa8] sm:$0xff]
      %v246 = vld [vmem:[%s149 + $0xb0] sm:$0xff]
      %v247 = vld [vmem:[%s149 + $0xb8] sm:$0xff]
      %v248 = vld [vmem:[%s149 + $0xc0] sm:$0xff]
      %v249 = vld [vmem:[%s149 + $0xc8] sm:$0xff]
      %v250 = vld [vmem:[%s149 + $0xd0] sm:$0xff]
      %v251 = vld [vmem:[%s149 + $0xd8] sm:$0xff]
      %v252 = vld [vmem:[%s149 + $0xe0] sm:$0xff]
      %v253 = vld [vmem:[%s149 + $0xe8] sm:$0xff]
      %v254 = vld [vmem:[%s149 + $0xf0] sm:$0xff]
      %v255 = vld [vmem:[%s149 + $0xf8] sm:$0xff]
      %v256 = vld [vmem:[%s5] sm:$0x1]
      %v257 = vld [vmem:[%s137] sm:$0xff]
      %v258 = vld [vmem:[%s137 + $0x8] sm:$0xff]
      %v259 = vld [vmem:[%s137 + $0x10] sm:$0xff]
      %v260 = vld [vmem:[%s137 + $0x18] sm:$0xff]
      %v261 = vld [vmem:[%s137 + $0x20] sm:$0xff]
      %v262 = vld [vmem:[%s137 + $0x28] sm:$0xff]
      %v263 = vld [vmem:[%s137 + $0x30] sm:$0xff]
      %v264 = vld [vmem:[%s137 + $0x38] sm:$0xff]
      %v265 = vld [vmem:[%s137 + $0x40] sm:$0xff]
      %v266 = vld [vmem:[%s137 + $0x48] sm:$0xff]
      %v267 = vld [vmem:[%s137 + $0x50] sm:$0xff]
      %v268 = vld [vmem:[%s137 + $0x58] sm:$0xff]
      %v269 = vld [vmem:[%s137 + $0x60] sm:$0xff]
      %v270 = vld [vmem:[%s137 + $0x68] sm:$0xff]
      %v271 = vld [vmem:[%s137 + $0x70] sm:$0xff]
      %v272 = vld [vmem:[%s137 + $0x78] sm:$0xff]
      %v273 = vld [vmem:[%s137 + $0x80] sm:$0xff]
      %v274 = vld [vmem:[%s137 + $0x88] sm:$0xff]
      %v275 = vld [vmem:[%s137 + $0x90] sm:$0xff]
      %v276 = vld [vmem:[%s137 + $0x98] sm:$0xff]
      %v277 = vld [vmem:[%s137 + $0xa0] sm:$0xff]
      %v278 = vld [vmem:[%s137 + $0xa8] sm:$0xff]
      %v279 = vld [vmem:[%s137 + $0xb0] sm:$0xff]
      %v280 = vld [vmem:[%s137 + $0xb8] sm:$0xff]
      %v281 = vld [vmem:[%s137 + $0xc0] sm:$0xff]
      %v282 = vld [vmem:[%s137 + $0xc8] sm:$0xff]
      %v283 = vld [vmem:[%s137 + $0xd0] sm:$0xff]
      %v284 = vld [vmem:[%s137 + $0xd8] sm:$0xff]
      %v285 = vld [vmem:[%s137 + $0xe0] sm:$0xff]
      %v286 = vld [vmem:[%s137 + $0xe8] sm:$0xff]
      %v287 = vld [vmem:[%s137 + $0xf0] sm:$0xff]
      %v288 = vld [vmem:[%s137 + $0xf8] sm:$0xff]
      %v289 = vlaneseq
      %v290 = vand.u32 %v289, 127
      %291 = vset.pattern.permute.xlu0 0
      %292 = vperm.xlu0 %291, %v257
      %v293 = vpop.permute.xlu0 %292
      %294 = vset.pattern.permute.xlu0 0
      %295 = vperm.xlu0 %294, %v258
      %v296 = vpop.permute.xlu0 %295
      %297 = vset.pattern.permute.xlu0 0
      %298 = vperm.xlu0 %297, %v259
      %v299 = vpop.permute.xlu0 %298
      %300 = vset.pattern.permute.xlu0 0
      %301 = vperm.xlu0 %300, %v260
      %v302 = vpop.permute.xlu0 %301
      %303 = vset.pattern.permute.xlu0 0
      %304 = vperm.xlu0 %303, %v261
      %v305 = vpop.permute.xlu0 %304
      %306 = vset.pattern.permute.xlu0 0
      %307 = vperm.xlu0 %306, %v262
      %v308 = vpop.permute.xlu0 %307
      %309 = vset.pattern.permute.xlu0 0
      %310 = vperm.xlu0 %309, %v263
      %v311 = vpop.permute.xlu0 %310
      %312 = vset.pattern.permute.xlu0 0
      %313 = vperm.xlu0 %312, %v264
      %v314 = vpop.permute.xlu0 %313
      %315 = vset.pattern.permute.xlu0 0
      %316 = vperm.xlu0 %315, %v265
      %v317 = vpop.permute.xlu0 %316
      %318 = vset.pattern.permute.xlu0 0
      %319 = vperm.xlu0 %318, %v266
      %v320 = vpop.permute.xlu0 %319
      %321 = vset.pattern.permute.xlu0 0
      %322 = vperm.xlu0 %321, %v267
      %v323 = vpop.permute.xlu0 %322
      %324 = vset.pattern.permute.xlu0 0
      %325 = vperm.xlu0 %324, %v268
      %v326 = vpop.permute.xlu0 %325
      %327 = vset.pattern.permute.xlu0 0
      %328 = vperm.xlu0 %327, %v269
      %v329 = vpop.permute.xlu0 %328
      %330 = vset.pattern.permute.xlu0 0
      %331 = vperm.xlu0 %330, %v270
      %v332 = vpop.permute.xlu0 %331
      %333 = vset.pattern.permute.xlu0 0
      %334 = vperm.xlu0 %333, %v271
      %v335 = vpop.permute.xlu0 %334
      %336 = vset.pattern.permute.xlu0 0
      %337 = vperm.xlu0 %336, %v272
      %v338 = vpop.permute.xlu0 %337
      %339 = vset.pattern.permute.xlu0 0
      %340 = vperm.xlu0 %339, %v273
      %v341 = vpop.permute.xlu0 %340
      %342 = vset.pattern.permute.xlu0 0
      %343 = vperm.xlu0 %342, %v274
      %v344 = vpop.permute.xlu0 %343
      %345 = vset.pattern.permute.xlu0 0
      %346 = vperm.xlu0 %345, %v275
      %v347 = vpop.permute.xlu0 %346
      %348 = vset.pattern.permute.xlu0 0
      %349 = vperm.xlu0 %348, %v276
      %v350 = vpop.permute.xlu0 %349
      %351 = vset.pattern.permute.xlu0 0
      %352 = vperm.xlu0 %351, %v277
      %v353 = vpop.permute.xlu0 %352
      %354 = vset.pattern.permute.xlu0 0
      %355 = vperm.xlu0 %354, %v278
      %v356 = vpop.permute.xlu0 %355
      %357 = vset.pattern.permute.xlu0 0
      %358 = vperm.xlu0 %357, %v279
      %v359 = vpop.permute.xlu0 %358
      %360 = vset.pattern.permute.xlu0 0
      %361 = vperm.xlu0 %360, %v280
      %v362 = vpop.permute.xlu0 %361
      %363 = vset.pattern.permute.xlu0 0
      %364 = vperm.xlu0 %363, %v281
      %v365 = vpop.permute.xlu0 %364
      %366 = vset.pattern.permute.xlu0 0
      %367 = vperm.xlu0 %366, %v282
      %v368 = vpop.permute.xlu0 %367
      %369 = vset.pattern.permute.xlu0 0
      %370 = vperm.xlu0 %369, %v283
      %v371 = vpop.permute.xlu0 %370
      %372 = vset.pattern.permute.xlu0 0
      %373 = vperm.xlu0 %372, %v284
      %v374 = vpop.permute.xlu0 %373
      %375 = vset.pattern.permute.xlu0 0
      %376 = vperm.xlu0 %375, %v285
      %v377 = vpop.permute.xlu0 %376
      %378 = vset.pattern.permute.xlu0 0
      %379 = vperm.xlu0 %378, %v286
      %v380 = vpop.permute.xlu0 %379
      %381 = vset.pattern.permute.xlu0 0
      %382 = vperm.xlu0 %381, %v287
      %v383 = vpop.permute.xlu0 %382
      %384 = vset.pattern.permute.xlu0 0
      %385 = vperm.xlu0 %384, %v288
      %v386 = vpop.permute.xlu0 %385
      %vm387 = vcmp.eq.s32.totalorder %v290, %v293
      %vm388 = vcmp.eq.s32.totalorder %v290, %v296
      %vm389 = vcmp.eq.s32.totalorder %v290, %v299
      %vm390 = vcmp.eq.s32.totalorder %v290, %v302
      %vm391 = vcmp.eq.s32.totalorder %v290, %v305
      %vm392 = vcmp.eq.s32.totalorder %v290, %v308
      %vm393 = vcmp.eq.s32.totalorder %v290, %v311
      %vm394 = vcmp.eq.s32.totalorder %v290, %v314
      %vm395 = vcmp.eq.s32.totalorder %v290, %v317
      %vm396 = vcmp.eq.s32.totalorder %v290, %v320
      %vm397 = vcmp.eq.s32.totalorder %v290, %v323
      %vm398 = vcmp.eq.s32.totalorder %v290, %v326
      %vm399 = vcmp.eq.s32.totalorder %v290, %v329
      %vm400 = vcmp.eq.s32.totalorder %v290, %v332
      %vm401 = vcmp.eq.s32.totalorder %v290, %v335
      %vm402 = vcmp.eq.s32.totalorder %v290, %v338
      %vm403 = vcmp.eq.s32.totalorder %v290, %v341
      %vm404 = vcmp.eq.s32.totalorder %v290, %v344
      %vm405 = vcmp.eq.s32.totalorder %v290, %v347
      %vm406 = vcmp.eq.s32.totalorder %v290, %v350
      %vm407 = vcmp.eq.s32.totalorder %v290, %v353
      %vm408 = vcmp.eq.s32.totalorder %v290, %v356
      %vm409 = vcmp.eq.s32.totalorder %v290, %v359
      %vm410 = vcmp.eq.s32.totalorder %v290, %v362
      %vm411 = vcmp.eq.s32.totalorder %v290, %v365
      %vm412 = vcmp.eq.s32.totalorder %v290, %v368
      %vm413 = vcmp.eq.s32.totalorder %v290, %v371
      %vm414 = vcmp.eq.s32.totalorder %v290, %v374
      %vm415 = vcmp.eq.s32.totalorder %v290, %v377
      %vm416 = vcmp.eq.s32.totalorder %v290, %v380
      %vm417 = vcmp.eq.s32.totalorder %v290, %v383
      %vm418 = vcmp.eq.s32.totalorder %v290, %v386
      %419 = vset.pattern.permute.xlu0 1
      %420 = vperm.xlu0 %419, %v257
      %v421 = vpop.permute.xlu0 %420
      %422 = vset.pattern.permute.xlu0 1
      %423 = vperm.xlu0 %422, %v258
      %v424 = vpop.permute.xlu0 %423
      %425 = vset.pattern.permute.xlu0 1
      %426 = vperm.xlu0 %425, %v259
      %v427 = vpop.permute.xlu0 %426
      %428 = vset.pattern.permute.xlu0 1
      %429 = vperm.xlu0 %428, %v260
      %v430 = vpop.permute.xlu0 %429
      %431 = vset.pattern.permute.xlu0 1
      %432 = vperm.xlu0 %431, %v261
      %v433 = vpop.permute.xlu0 %432
      %434 = vset.pattern.permute.xlu0 1
      %435 = vperm.xlu0 %434, %v262
      %v436 = vpop.permute.xlu0 %435
      %437 = vset.pattern.permute.xlu0 1
      %438 = vperm.xlu0 %437, %v263
      %v439 = vpop.permute.xlu0 %438
      %440 = vset.pattern.permute.xlu0 1
      %441 = vperm.xlu0 %440, %v264
      %v442 = vpop.permute.xlu0 %441
      %443 = vset.pattern.permute.xlu0 1
      %444 = vperm.xlu0 %443, %v265
      %v445 = vpop.permute.xlu0 %444
      %446 = vset.pattern.permute.xlu0 1
      %447 = vperm.xlu0 %446, %v266
      %v448 = vpop.permute.xlu0 %447
      %449 = vset.pattern.permute.xlu0 1
      %450 = vperm.xlu0 %449, %v267
      %v451 = vpop.permute.xlu0 %450
      %452 = vset.pattern.permute.xlu0 1
      %453 = vperm.xlu0 %452, %v268
      %v454 = vpop.permute.xlu0 %453
      %455 = vset.pattern.permute.xlu0 1
      %456 = vperm.xlu0 %455, %v269
      %v457 = vpop.permute.xlu0 %456
      %458 = vset.pattern.permute.xlu0 1
      %459 = vperm.xlu0 %458, %v270
      %v460 = vpop.permute.xlu0 %459
      %461 = vset.pattern.permute.xlu0 1
      %462 = vperm.xlu0 %461, %v271
      %v463 = vpop.permute.xlu0 %462
      %464 = vset.pattern.permute.xlu0 1
      %465 = vperm.xlu0 %464, %v272
      %v466 = vpop.permute.xlu0 %465
      %467 = vset.pattern.permute.xlu0 1
      %468 = vperm.xlu0 %467, %v273
      %v469 = vpop.permute.xlu0 %468
      %470 = vset.pattern.permute.xlu0 1
      %471 = vperm.xlu0 %470, %v274
      %v472 = vpop.permute.xlu0 %471
      %473 = vset.pattern.permute.xlu0 1
      %474 = vperm.xlu0 %473, %v275
      %v475 = vpop.permute.xlu0 %474
      %476 = vset.pattern.permute.xlu0 1
      %477 = vperm.xlu0 %476, %v276
      %v478 = vpop.permute.xlu0 %477
      %479 = vset.pattern.permute.xlu0 1
      %480 = vperm.xlu0 %479, %v277
      %v481 = vpop.permute.xlu0 %480
      %482 = vset.pattern.permute.xlu0 1
      %483 = vperm.xlu0 %482, %v278
      %v484 = vpop.permute.xlu0 %483
      %485 = vset.pattern.permute.xlu0 1
      %486 = vperm.xlu0 %485, %v279
      %v487 = vpop.permute.xlu0 %486
      %488 = vset.pattern.permute.xlu0 1
      %489 = vperm.xlu0 %488, %v280
      %v490 = vpop.permute.xlu0 %489
      %491 = vset.pattern.permute.xlu0 1
      %492 = vperm.xlu0 %491, %v281
      %v493 = vpop.permute.xlu0 %492
      %494 = vset.pattern.permute.xlu0 1
      %495 = vperm.xlu0 %494, %v282
      %v496 = vpop.permute.xlu0 %495
      %497 = vset.pattern.permute.xlu0 1
      %498 = vperm.xlu0 %497, %v283
      %v499 = vpop.permute.xlu0 %498
      %500 = vset.pattern.permute.xlu0 1
      %501 = vperm.xlu0 %500, %v284
      %v502 = vpop.permute.xlu0 %501
      %503 = vset.pattern.permute.xlu0 1
      %504 = vperm.xlu0 %503, %v285
      %v505 = vpop.permute.xlu0 %504
      %506 = vset.pattern.permute.xlu0 1
      %507 = vperm.xlu0 %506, %v286
      %v508 = vpop.permute.xlu0 %507
      %509 = vset.pattern.permute.xlu0 1
      %510 = vperm.xlu0 %509, %v287
      %v511 = vpop.permute.xlu0 %510
      %512 = vset.pattern.permute.xlu0 1
      %513 = vperm.xlu0 %512, %v288
      %v514 = vpop.permute.xlu0 %513
      %vm515 = vcmp.eq.s32.totalorder %v290, %v421
      %vm516 = vcmp.eq.s32.totalorder %v290, %v424
      %vm517 = vcmp.eq.s32.totalorder %v290, %v427
      %vm518 = vcmp.eq.s32.totalorder %v290, %v430
      %vm519 = vcmp.eq.s32.totalorder %v290, %v433
      %vm520 = vcmp.eq.s32.totalorder %v290, %v436
      %vm521 = vcmp.eq.s32.totalorder %v290, %v439
      %vm522 = vcmp.eq.s32.totalorder %v290, %v442
      %vm523 = vcmp.eq.s32.totalorder %v290, %v445
      %vm524 = vcmp.eq.s32.totalorder %v290, %v448
      %vm525 = vcmp.eq.s32.totalorder %v290, %v451
      %vm526 = vcmp.eq.s32.totalorder %v290, %v454
      %vm527 = vcmp.eq.s32.totalorder %v290, %v457
      %vm528 = vcmp.eq.s32.totalorder %v290, %v460
      %vm529 = vcmp.eq.s32.totalorder %v290, %v463
      %vm530 = vcmp.eq.s32.totalorder %v290, %v466
      %vm531 = vcmp.eq.s32.totalorder %v290, %v469
      %vm532 = vcmp.eq.s32.totalorder %v290, %v472
      %vm533 = vcmp.eq.s32.totalorder %v290, %v475
      %vm534 = vcmp.eq.s32.totalorder %v290, %v478
      %vm535 = vcmp.eq.s32.totalorder %v290, %v481
      %vm536 = vcmp.eq.s32.totalorder %v290, %v484
      %vm537 = vcmp.eq.s32.totalorder %v290, %v487
      %vm538 = vcmp.eq.s32.totalorder %v290, %v490
      %vm539 = vcmp.eq.s32.totalorder %v290, %v493
      %vm540 = vcmp.eq.s32.totalorder %v290, %v496
      %vm541 = vcmp.eq.s32.totalorder %v290, %v499
      %vm542 = vcmp.eq.s32.totalorder %v290, %v502
      %vm543 = vcmp.eq.s32.totalorder %v290, %v505
      %vm544 = vcmp.eq.s32.totalorder %v290, %v508
      %vm545 = vcmp.eq.s32.totalorder %v290, %v511
      %vm546 = vcmp.eq.s32.totalorder %v290, %v514
      %v547 = vld [vmem:[#allocation2] sm:$0x1]
      %v548 = vsel %vm387, %v192, 0.0
      %v549 = vsel %vm388, %v193, 0.0
      %v550 = vsel %vm389, %v194, 0.0
      %v551 = vsel %vm390, %v195, 0.0
      %v552 = vsel %vm391, %v196, 0.0
      %v553 = vsel %vm392, %v197, 0.0
      %v554 = vsel %vm393, %v198, 0.0
      %v555 = vsel %vm394, %v199, 0.0
      %v556 = vsel %vm395, %v200, 0.0
      %v557 = vsel %vm396, %v201, 0.0
      %v558 = vsel %vm397, %v202, 0.0
      %v559 = vsel %vm398, %v203, 0.0
      %v560 = vsel %vm399, %v204, 0.0
      %v561 = vsel %vm400, %v205, 0.0
      %v562 = vsel %vm401, %v206, 0.0
      %v563 = vsel %vm402, %v207, 0.0
      %v564 = vsel %vm403, %v208, 0.0
      %v565 = vsel %vm404, %v209, 0.0
      %v566 = vsel %vm405, %v210, 0.0
      %v567 = vsel %vm406, %v211, 0.0
      %v568 = vsel %vm407, %v212, 0.0
      %v569 = vsel %vm408, %v213, 0.0
      %v570 = vsel %vm409, %v214, 0.0
      %v571 = vsel %vm410, %v215, 0.0
      %v572 = vsel %vm411, %v216, 0.0
      %v573 = vsel %vm412, %v217, 0.0
      %v574 = vsel %vm413, %v218, 0.0
      %v575 = vsel %vm414, %v219, 0.0
      %v576 = vsel %vm415, %v220, 0.0
      %v577 = vsel %vm416, %v221, 0.0
      %v578 = vsel %vm417, %v222, 0.0
      %v579 = vsel %vm418, %v223, 0.0
      %vm580 = vcmask 105472
      %v581 = vsel %vm580, %v548, 0.0
      %v582 = vsel %vm580, %v549, 0.0
      %v583 = vadd.f32 %v581, %v582
      %v584 = vsel %vm580, %v550, 0.0
      %v585 = vadd.f32 %v583, %v584
      %v586 = vsel %vm580, %v551, 0.0
      %v587 = vadd.f32 %v585, %v586
      %v588 = vsel %vm580, %v552, 0.0
      %v589 = vadd.f32 %v587, %v588
      %v590 = vsel %vm580, %v553, 0.0
      %v591 = vadd.f32 %v589, %v590
      %v592 = vsel %vm580, %v554, 0.0
      %v593 = vadd.f32 %v591, %v592
      %v594 = vsel %vm580, %v555, 0.0
      %v595 = vadd.f32 %v593, %v594
      %v596 = vsel %vm580, %v556, 0.0
      %v597 = vadd.f32 %v595, %v596
      %v598 = vsel %vm580, %v557, 0.0
      %v599 = vadd.f32 %v597, %v598
      %v600 = vsel %vm580, %v558, 0.0
      %v601 = vadd.f32 %v599, %v600
      %v602 = vsel %vm580, %v559, 0.0
      %v603 = vadd.f32 %v601, %v602
      %v604 = vsel %vm580, %v560, 0.0
      %v605 = vadd.f32 %v603, %v604
      %v606 = vsel %vm580, %v561, 0.0
      %v607 = vadd.f32 %v605, %v606
      %v608 = vsel %vm580, %v562, 0.0
      %v609 = vadd.f32 %v607, %v608
      %v610 = vsel %vm580, %v563, 0.0
      %v611 = vadd.f32 %v609, %v610
      %v612 = vsel %vm580, %v564, 0.0
      %v613 = vadd.f32 %v611, %v612
      %v614 = vsel %vm580, %v565, 0.0
      %v615 = vadd.f32 %v613, %v614
      %v616 = vsel %vm580, %v566, 0.0
      %v617 = vadd.f32 %v615, %v616
      %v618 = vsel %vm580, %v567, 0.0
      %v619 = vadd.f32 %v617, %v618
      %v620 = vsel %vm580, %v568, 0.0
      %v621 = vadd.f32 %v619, %v620
      %v622 = vsel %vm580, %v569, 0.0
      %v623 = vadd.f32 %v621, %v622
      %v624 = vsel %vm580, %v570, 0.0
      %v625 = vadd.f32 %v623, %v624
      %v626 = vsel %vm580, %v571, 0.0
      %v627 = vadd.f32 %v625, %v626
      %v628 = vsel %vm580, %v572, 0.0
      %v629 = vadd.f32 %v627, %v628
      %v630 = vsel %vm580, %v573, 0.0
      %v631 = vadd.f32 %v629, %v630
      %v632 = vsel %vm580, %v574, 0.0
      %v633 = vadd.f32 %v631, %v632
      %v634 = vsel %vm580, %v575, 0.0
      %v635 = vadd.f32 %v633, %v634
      %v636 = vsel %vm580, %v576, 0.0
      %v637 = vadd.f32 %v635, %v636
      %v638 = vsel %vm580, %v577, 0.0
      %v639 = vadd.f32 %v637, %v638
      %v640 = vsel %vm580, %v578, 0.0
      %v641 = vadd.f32 %v639, %v640
      %v642 = vsel %vm580, %v579, 0.0
      %v643 = vadd.f32 %v641, %v642
      %v644 = vrot.slane %v643, 4
      %v645 = vadd.f32 %v643, %v644
      %v646 = vrot.slane %v645, 2
      %v647 = vadd.f32 %v645, %v646
      %v648 = vrot.slane %v647, 1
      %v649 = vadd.f32 %v647, %v648
      %v650 = vadd.f32 %v547, %v649
      %vm651 = vcmask 98304
      %652 = vst.msk [vmem:[#allocation2] sm:$0x1] %vm651, %v650
      %v654 = vlaneseq
      %v655 = vshrl.u32 %v654, 7
      %v656 = vsub.s32 0, %v655
      %v657 = vrot.slane %v256, %v656
      %v659 = vsel %vm515, %v657, 0.0
      %v660 = vsel %vm516, %v657, 0.0
      %v661 = vsel %vm517, %v657, 0.0
      %v662 = vsel %vm518, %v657, 0.0
      %v663 = vsel %vm519, %v657, 0.0
      %v664 = vsel %vm520, %v657, 0.0
      %v665 = vsel %vm521, %v657, 0.0
      %v666 = vsel %vm522, %v657, 0.0
      %v667 = vsel %vm523, %v657, 0.0
      %v668 = vsel %vm524, %v657, 0.0
      %v669 = vsel %vm525, %v657, 0.0
      %v670 = vsel %vm526, %v657, 0.0
      %v671 = vsel %vm527, %v657, 0.0
      %v672 = vsel %vm528, %v657, 0.0
      %v673 = vsel %vm529, %v657, 0.0
      %v674 = vsel %vm530, %v657, 0.0
      %v675 = vsel %vm531, %v657, 0.0
      %v676 = vsel %vm532, %v657, 0.0
      %v677 = vsel %vm533, %v657, 0.0
      %v678 = vsel %vm534, %v657, 0.0
      %v679 = vsel %vm535, %v657, 0.0
      %v680 = vsel %vm536, %v657, 0.0
      %v681 = vsel %vm537, %v657, 0.0
      %v682 = vsel %vm538, %v657, 0.0
      %v683 = vsel %vm539, %v657, 0.0
      %v684 = vsel %vm540, %v657, 0.0
      %v685 = vsel %vm541, %v657, 0.0
      %v686 = vsel %vm542, %v657, 0.0
      %v687 = vsel %vm543, %v657, 0.0
      %v688 = vsel %vm544, %v657, 0.0
      %v689 = vsel %vm545, %v657, 0.0
      %v690 = vsel %vm546, %v657, 0.0
      %v691 = vmul.f32 %v659, %v224
      %v692 = vmul.f32 %v660, %v225
      %v693 = vmul.f32 %v661, %v226
      %v694 = vmul.f32 %v662, %v227
      %v695 = vmul.f32 %v663, %v228
      %v696 = vmul.f32 %v664, %v229
      %v697 = vmul.f32 %v665, %v230
      %v698 = vmul.f32 %v666, %v231
      %v699 = vmul.f32 %v667, %v232
      %v700 = vmul.f32 %v668, %v233
      %v701 = vmul.f32 %v669, %v234
      %v702 = vmul.f32 %v670, %v235
      %v703 = vmul.f32 %v671, %v236
      %v704 = vmul.f32 %v672, %v237
      %v705 = vmul.f32 %v673, %v238
      %v706 = vmul.f32 %v674, %v239
      %v707 = vmul.f32 %v675, %v240
      %v708 = vmul.f32 %v676, %v241
      %v709 = vmul.f32 %v677, %v242
      %v710 = vmul.f32 %v678, %v243
      %v711 = vmul.f32 %v679, %v244
      %v712 = vmul.f32 %v680, %v245
      %v713 = vmul.f32 %v681, %v246
      %v714 = vmul.f32 %v682, %v247
      %v715 = vmul.f32 %v683, %v248
      %v716 = vmul.f32 %v684, %v249
      %v717 = vmul.f32 %v685, %v250
      %v718 = vmul.f32 %v686, %v251
      %v719 = vmul.f32 %v687, %v252
      %v720 = vmul.f32 %v688, %v253
      %v721 = vmul.f32 %v689, %v254
      %v722 = vmul.f32 %v690, %v255
      %v723 = vld [vmem:[#allocation3] sm:$0x1]
      %vm724 = vcmask 15360
      %v725 = vsel %vm724, %v691, 0.0
      %v726 = vsel %vm724, %v692, 0.0
      %v727 = vadd.f32 %v725, %v726
      %v728 = vsel %vm724, %v693, 0.0
      %v729 = vadd.f32 %v727, %v728
      %v730 = vsel %vm724, %v694, 0.0
      %v731 = vadd.f32 %v729, %v730
      %v732 = vsel %vm724, %v695, 0.0
      %v733 = vadd.f32 %v731, %v732
      %v734 = vsel %vm724, %v696, 0.0
      %v735 = vadd.f32 %v733, %v734
      %v736 = vsel %vm724, %v697, 0.0
      %v737 = vadd.f32 %v735, %v736
      %v738 = vsel %vm724, %v698, 0.0
      %v739 = vadd.f32 %v737, %v738
      %v740 = vsel %vm724, %v699, 0.0
      %v741 = vadd.f32 %v739, %v740
      %v742 = vsel %vm724, %v700, 0.0
      %v743 = vadd.f32 %v741, %v742
      %v744 = vsel %vm724, %v701, 0.0
      %v745 = vadd.f32 %v743, %v744
      %v746 = vsel %vm724, %v702, 0.0
      %v747 = vadd.f32 %v745, %v746
      %v748 = vsel %vm724, %v703, 0.0
      %v749 = vadd.f32 %v747, %v748
      %v750 = vsel %vm724, %v704, 0.0
      %v751 = vadd.f32 %v749, %v750
      %v752 = vsel %vm724, %v705, 0.0
      %v753 = vadd.f32 %v751, %v752
      %v754 = vsel %vm724, %v706, 0.0
      %v755 = vadd.f32 %v753, %v754
      %v756 = vsel %vm724, %v707, 0.0
      %v757 = vadd.f32 %v755, %v756
      %v758 = vsel %vm724, %v708, 0.0
      %v759 = vadd.f32 %v757, %v758
      %v760 = vsel %vm724, %v709, 0.0
      %v761 = vadd.f32 %v759, %v760
      %v762 = vsel %vm724, %v710, 0.0
      %v763 = vadd.f32 %v761, %v762
      %v764 = vsel %vm724, %v711, 0.0
      %v765 = vadd.f32 %v763, %v764
      %v766 = vsel %vm724, %v712, 0.0
      %v767 = vadd.f32 %v765, %v766
      %v768 = vsel %vm724, %v713, 0.0
      %v769 = vadd.f32 %v767, %v768
      %v770 = vsel %vm724, %v714, 0.0
      %v771 = vadd.f32 %v769, %v770
      %v772 = vsel %vm724, %v715, 0.0
      %v773 = vadd.f32 %v771, %v772
      %v774 = vsel %vm724, %v716, 0.0
      %v775 = vadd.f32 %v773, %v774
      %v776 = vsel %vm724, %v717, 0.0
      %v777 = vadd.f32 %v775, %v776
      %v778 = vsel %vm724, %v718, 0.0
      %v779 = vadd.f32 %v777, %v778
      %v780 = vsel %vm724, %v719, 0.0
      %v781 = vadd.f32 %v779, %v780
      %v782 = vsel %vm724, %v720, 0.0
      %v783 = vadd.f32 %v781, %v782
      %v784 = vsel %vm724, %v721, 0.0
      %v785 = vadd.f32 %v783, %v784
      %v786 = vsel %vm724, %v722, 0.0
      %v787 = vadd.f32 %v785, %v786
      %v788 = vrot.slane %v787, 4
      %v789 = vadd.f32 %v787, %v788
      %v790 = vrot.slane %v789, 2
      %v791 = vadd.f32 %v789, %v790
      %v792 = vrot.slane %v791, 1
      %v793 = vadd.f32 %v791, %v792
      %v794 = vadd.f32 %v723, %v793
      %vm795 = vcmask 8192
      %796 = vst.msk [vmem:[#allocation3] sm:$0x1] %vm795, %v794
      %v797 = vld [vmem:[#allocation4] sm:$0x1]
      %v798 = vsel %vm724, %v659, 0.0
      %v799 = vsel %vm724, %v660, 0.0
      %v800 = vadd.f32 %v798, %v799
      %v801 = vsel %vm724, %v661, 0.0
      %v802 = vadd.f32 %v800, %v801
      %v803 = vsel %vm724, %v662, 0.0
      %v804 = vadd.f32 %v802, %v803
      %v805 = vsel %vm724, %v663, 0.0
      %v806 = vadd.f32 %v804, %v805
      %v807 = vsel %vm724, %v664, 0.0
      %v808 = vadd.f32 %v806, %v807
      %v809 = vsel %vm724, %v665, 0.0
      %v810 = vadd.f32 %v808, %v809
      %v811 = vsel %vm724, %v666, 0.0
      %v812 = vadd.f32 %v810, %v811
      %v813 = vsel %vm724, %v667, 0.0
      %v814 = vadd.f32 %v812, %v813
      %v815 = vsel %vm724, %v668, 0.0
      %v816 = vadd.f32 %v814, %v815
      %v817 = vsel %vm724, %v669, 0.0
      %v818 = vadd.f32 %v816, %v817
      %v819 = vsel %vm724, %v670, 0.0
      %v820 = vadd.f32 %v818, %v819
      %v821 = vsel %vm724, %v671, 0.0
      %v822 = vadd.f32 %v820, %v821
      %v823 = vsel %vm724, %v672, 0.0
      %v824 = vadd.f32 %v822, %v823
      %v825 = vsel %vm724, %v673, 0.0
      %v826 = vadd.f32 %v824, %v825
      %v827 = vsel %vm724, %v674, 0.0
      %v828 = vadd.f32 %v826, %v827
      %v829 = vsel %vm724, %v675, 0.0
      %v830 = vadd.f32 %v828, %v829
      %v831 = vsel %vm724, %v676, 0.0
      %v832 = vadd.f32 %v830, %v831
      %v833 = vsel %vm724, %v677, 0.0
      %v834 = vadd.f32 %v832, %v833
      %v835 = vsel %vm724, %v678, 0.0
      %v836 = vadd.f32 %v834, %v835
      %v837 = vsel %vm724, %v679, 0.0
      %v838 = vadd.f32 %v836, %v837
      %v839 = vsel %vm724, %v680, 0.0
      %v840 = vadd.f32 %v838, %v839
      %v841 = vsel %vm724, %v681, 0.0
      %v842 = vadd.f32 %v840, %v841
      %v843 = vsel %vm724, %v682, 0.0
      %v844 = vadd.f32 %v842, %v843
      %v845 = vsel %vm724, %v683, 0.0
      %v846 = vadd.f32 %v844, %v845
      %v847 = vsel %vm724, %v684, 0.0
      %v848 = vadd.f32 %v846, %v847
      %v849 = vsel %vm724, %v685, 0.0
      %v850 = vadd.f32 %v848, %v849
      %v851 = vsel %vm724, %v686, 0.0
      %v852 = vadd.f32 %v850, %v851
      %v853 = vsel %vm724, %v687, 0.0
      %v854 = vadd.f32 %v852, %v853
      %v855 = vsel %vm724, %v688, 0.0
      %v856 = vadd.f32 %v854, %v855
      %v857 = vsel %vm724, %v689, 0.0
      %v858 = vadd.f32 %v856, %v857
      %v859 = vsel %vm724, %v690, 0.0
      %v860 = vadd.f32 %v858, %v859
      %v861 = vrot.slane %v860, 4
      %v862 = vadd.f32 %v860, %v861
      %v863 = vrot.slane %v862, 2
      %v864 = vadd.f32 %v862, %v863
      %v865 = vrot.slane %v864, 1
      %v866 = vadd.f32 %v864, %v865
      %v867 = vadd.f32 %v797, %v866
      %868 = vst.msk [vmem:[#allocation4] sm:$0x1] %vm795, %v867
      %v869 = vld [vmem:[%s160] sm:$0xff]
      %v870 = vld [vmem:[%s170] sm:$0xff]
      %v871 = vsub.f32 %v869, %v870
      %v872 = vld [vmem:[#allocation5] sm:$0x1]
      %v873 = vmul.f32 %v871, %v871
      %v874 = vrot.slane %v873, 4
      %v875 = vadd.f32 %v873, %v874
      %v876 = vrot.slane %v875, 2
      %v877 = vadd.f32 %v875, %v876
      %v878 = vrot.slane %v877, 1
      %v879 = vadd.f32 %v877, %v878
      %v880 = vadd.f32 %v872, %v879
      %881 = vst [vmem:[#allocation5] sm:$0x1] %v880
    $region33: #{tpu_custom_call.1} parent=1 // pred_fallthru
      _
    %p882 = scmp.gt.s32.totalorder %s187, 256
    %p883 = pnand %p186, %p882
    %p884 = pneg %p883
    // Predicated region
    $region34: #{tpu_custom_call.1} parent=1 // pred_check
      _
    $region35: #{tpu_custom_call.1} parent=1 // pred_check_branch
      %886 = sbr.rel (%p883) target = $region37
    $region36: #{tpu_custom_call.1} parent=1 // pred_region
      %v887 = vld [vmem:[%s125] sm:$0xff]
      %v888 = vld [vmem:[%s125 + $0x8] sm:$0xff]
      %v889 = vld [vmem:[%s125 + $0x10] sm:$0xff]
      %v890 = vld [vmem:[%s125 + $0x18] sm:$0xff]
      %v891 = vld [vmem:[%s125 + $0x20] sm:$0xff]
      %v892 = vld [vmem:[%s125 + $0x28] sm:$0xff]
      %v893 = vld [vmem:[%s125 + $0x30] sm:$0xff]
      %v894 = vld [vmem:[%s125 + $0x38] sm:$0xff]
      %v895 = vld [vmem:[%s125 + $0x40] sm:$0xff]
      %v896 = vld [vmem:[%s125 + $0x48] sm:$0xff]
      %v897 = vld [vmem:[%s125 + $0x50] sm:$0xff]
      %v898 = vld [vmem:[%s125 + $0x58] sm:$0xff]
      %v899 = vld [vmem:[%s125 + $0x60] sm:$0xff]
      %v900 = vld [vmem:[%s125 + $0x68] sm:$0xff]
      %v901 = vld [vmem:[%s125 + $0x70] sm:$0xff]
      %v902 = vld [vmem:[%s125 + $0x78] sm:$0xff]
      %v903 = vld [vmem:[%s125 + $0x80] sm:$0xff]
      %v904 = vld [vmem:[%s125 + $0x88] sm:$0xff]
      %v905 = vld [vmem:[%s125 + $0x90] sm:$0xff]
      %v906 = vld [vmem:[%s125 + $0x98] sm:$0xff]
      %v907 = vld [vmem:[%s125 + $0xa0] sm:$0xff]
      %v908 = vld [vmem:[%s125 + $0xa8] sm:$0xff]
      %v909 = vld [vmem:[%s125 + $0xb0] sm:$0xff]
      %v910 = vld [vmem:[%s125 + $0xb8] sm:$0xff]
      %v911 = vld [vmem:[%s125 + $0xc0] sm:$0xff]
      %v912 = vld [vmem:[%s125 + $0xc8] sm:$0xff]
      %v913 = vld [vmem:[%s125 + $0xd0] sm:$0xff]
      %v914 = vld [vmem:[%s125 + $0xd8] sm:$0xff]
      %v915 = vld [vmem:[%s125 + $0xe0] sm:$0xff]
      %v916 = vld [vmem:[%s125 + $0xe8] sm:$0xff]
      %v917 = vld [vmem:[%s125 + $0xf0] sm:$0xff]
      %v918 = vld [vmem:[%s125 + $0xf8] sm:$0xff]
      %v919 = vld [vmem:[%s149] sm:$0xff]
      %v920 = vld [vmem:[%s149 + $0x8] sm:$0xff]
      %v921 = vld [vmem:[%s149 + $0x10] sm:$0xff]
      %v922 = vld [vmem:[%s149 + $0x18] sm:$0xff]
      %v923 = vld [vmem:[%s149 + $0x20] sm:$0xff]
      %v924 = vld [vmem:[%s149 + $0x28] sm:$0xff]
      %v925 = vld [vmem:[%s149 + $0x30] sm:$0xff]
      %v926 = vld [vmem:[%s149 + $0x38] sm:$0xff]
      %v927 = vld [vmem:[%s149 + $0x40] sm:$0xff]
      %v928 = vld [vmem:[%s149 + $0x48] sm:$0xff]
      %v929 = vld [vmem:[%s149 + $0x50] sm:$0xff]
      %v930 = vld [vmem:[%s149 + $0x58] sm:$0xff]
      %v931 = vld [vmem:[%s149 + $0x60] sm:$0xff]
      %v932 = vld [vmem:[%s149 + $0x68] sm:$0xff]
      %v933 = vld [vmem:[%s149 + $0x70] sm:$0xff]
      %v934 = vld [vmem:[%s149 + $0x78] sm:$0xff]
      %v935 = vld [vmem:[%s149 + $0x80] sm:$0xff]
      %v936 = vld [vmem:[%s149 + $0x88] sm:$0xff]
      %v937 = vld [vmem:[%s149 + $0x90] sm:$0xff]
      %v938 = vld [vmem:[%s149 + $0x98] sm:$0xff]
      %v939 = vld [vmem:[%s149 + $0xa0] sm:$0xff]
      %v940 = vld [vmem:[%s149 + $0xa8] sm:$0xff]
      %v941 = vld [vmem:[%s149 + $0xb0] sm:$0xff]
      %v942 = vld [vmem:[%s149 + $0xb8] sm:$0xff]
      %v943 = vld [vmem:[%s149 + $0xc0] sm:$0xff]
      %v944 = vld [vmem:[%s149 + $0xc8] sm:$0xff]
      %v945 = vld [vmem:[%s149 + $0xd0] sm:$0xff]
      %v946 = vld [vmem:[%s149 + $0xd8] sm:$0xff]
      %v947 = vld [vmem:[%s149 + $0xe0] sm:$0xff]
      %v948 = vld [vmem:[%s149 + $0xe8] sm:$0xff]
      %v949 = vld [vmem:[%s149 + $0xf0] sm:$0xff]
      %v950 = vld [vmem:[%s149 + $0xf8] sm:$0xff]
      %v951 = vld [vmem:[%s5] sm:$0x1]
      %v952 = vld [vmem:[%s137] sm:$0xff]
      %v953 = vld [vmem:[%s137 + $0x8] sm:$0xff]
      %v954 = vld [vmem:[%s137 + $0x10] sm:$0xff]
      %v955 = vld [vmem:[%s137 + $0x18] sm:$0xff]
      %v956 = vld [vmem:[%s137 + $0x20] sm:$0xff]
      %v957 = vld [vmem:[%s137 + $0x28] sm:$0xff]
      %v958 = vld [vmem:[%s137 + $0x30] sm:$0xff]
      %v959 = vld [vmem:[%s137 + $0x38] sm:$0xff]
      %v960 = vld [vmem:[%s137 + $0x40] sm:$0xff]
      %v961 = vld [vmem:[%s137 + $0x48] sm:$0xff]
      %v962 = vld [vmem:[%s137 + $0x50] sm:$0xff]
      %v963 = vld [vmem:[%s137 + $0x58] sm:$0xff]
      %v964 = vld [vmem:[%s137 + $0x60] sm:$0xff]
      %v965 = vld [vmem:[%s137 + $0x68] sm:$0xff]
      %v966 = vld [vmem:[%s137 + $0x70] sm:$0xff]
      %v967 = vld [vmem:[%s137 + $0x78] sm:$0xff]
      %v968 = vld [vmem:[%s137 + $0x80] sm:$0xff]
      %v969 = vld [vmem:[%s137 + $0x88] sm:$0xff]
      %v970 = vld [vmem:[%s137 + $0x90] sm:$0xff]
      %v971 = vld [vmem:[%s137 + $0x98] sm:$0xff]
      %v972 = vld [vmem:[%s137 + $0xa0] sm:$0xff]
      %v973 = vld [vmem:[%s137 + $0xa8] sm:$0xff]
      %v974 = vld [vmem:[%s137 + $0xb0] sm:$0xff]
      %v975 = vld [vmem:[%s137 + $0xb8] sm:$0xff]
      %v976 = vld [vmem:[%s137 + $0xc0] sm:$0xff]
      %v977 = vld [vmem:[%s137 + $0xc8] sm:$0xff]
      %v978 = vld [vmem:[%s137 + $0xd0] sm:$0xff]
      %v979 = vld [vmem:[%s137 + $0xd8] sm:$0xff]
      %v980 = vld [vmem:[%s137 + $0xe0] sm:$0xff]
      %v981 = vld [vmem:[%s137 + $0xe8] sm:$0xff]
      %v982 = vld [vmem:[%s137 + $0xf0] sm:$0xff]
      %v983 = vld [vmem:[%s137 + $0xf8] sm:$0xff]
      %v984 = vlaneseq
      %v985 = vand.u32 %v984, 127
      %986 = vset.pattern.permute.xlu0 0
      %987 = vperm.xlu0 %986, %v952
      %v988 = vpop.permute.xlu0 %987
      %989 = vset.pattern.permute.xlu0 0
      %990 = vperm.xlu0 %989, %v953
      %v991 = vpop.permute.xlu0 %990
      %992 = vset.pattern.permute.xlu0 0
      %993 = vperm.xlu0 %992, %v954
      %v994 = vpop.permute.xlu0 %993
      %995 = vset.pattern.permute.xlu0 0
      %996 = vperm.xlu0 %995, %v955
      %v997 = vpop.permute.xlu0 %996
      %998 = vset.pattern.permute.xlu0 0
      %999 = vperm.xlu0 %998, %v956
      %v1000 = vpop.permute.xlu0 %999
      %1001 = vset.pattern.permute.xlu0 0
      %1002 = vperm.xlu0 %1001, %v957
      %v1003 = vpop.permute.xlu0 %1002
      %1004 = vset.pattern.permute.xlu0 0
      %1005 = vperm.xlu0 %1004, %v958
      %v1006 = vpop.permute.xlu0 %1005
      %1007 = vset.pattern.permute.xlu0 0
      %1008 = vperm.xlu0 %1007, %v959
      %v1009 = vpop.permute.xlu0 %1008
      %1010 = vset.pattern.permute.xlu0 0
      %1011 = vperm.xlu0 %1010, %v960
      %v1012 = vpop.permute.xlu0 %1011
      %1013 = vset.pattern.permute.xlu0 0
      %1014 = vperm.xlu0 %1013, %v961
      %v1015 = vpop.permute.xlu0 %1014
      %1016 = vset.pattern.permute.xlu0 0
      %1017 = vperm.xlu0 %1016, %v962
      %v1018 = vpop.permute.xlu0 %1017
      %1019 = vset.pattern.permute.xlu0 0
      %1020 = vperm.xlu0 %1019, %v963
      %v1021 = vpop.permute.xlu0 %1020
      %1022 = vset.pattern.permute.xlu0 0
      %1023 = vperm.xlu0 %1022, %v964
      %v1024 = vpop.permute.xlu0 %1023
      %1025 = vset.pattern.permute.xlu0 0
      %1026 = vperm.xlu0 %1025, %v965
      %v1027 = vpop.permute.xlu0 %1026
      %1028 = vset.pattern.permute.xlu0 0
      %1029 = vperm.xlu0 %1028, %v966
      %v1030 = vpop.permute.xlu0 %1029
      %1031 = vset.pattern.permute.xlu0 0
      %1032 = vperm.xlu0 %1031, %v967
      %v1033 = vpop.permute.xlu0 %1032
      %1034 = vset.pattern.permute.xlu0 0
      %1035 = vperm.xlu0 %1034, %v968
      %v1036 = vpop.permute.xlu0 %1035
      %1037 = vset.pattern.permute.xlu0 0
      %1038 = vperm.xlu0 %1037, %v969
      %v1039 = vpop.permute.xlu0 %1038
      %1040 = vset.pattern.permute.xlu0 0
      %1041 = vperm.xlu0 %1040, %v970
      %v1042 = vpop.permute.xlu0 %1041
      %1043 = vset.pattern.permute.xlu0 0
      %1044 = vperm.xlu0 %1043, %v971
      %v1045 = vpop.permute.xlu0 %1044
      %1046 = vset.pattern.permute.xlu0 0
      %1047 = vperm.xlu0 %1046, %v972
      %v1048 = vpop.permute.xlu0 %1047
      %1049 = vset.pattern.permute.xlu0 0
      %1050 = vperm.xlu0 %1049, %v973
      %v1051 = vpop.permute.xlu0 %1050
      %1052 = vset.pattern.permute.xlu0 0
      %1053 = vperm.xlu0 %1052, %v974
      %v1054 = vpop.permute.xlu0 %1053
      %1055 = vset.pattern.permute.xlu0 0
      %1056 = vperm.xlu0 %1055, %v975
      %v1057 = vpop.permute.xlu0 %1056
      %1058 = vset.pattern.permute.xlu0 0
      %1059 = vperm.xlu0 %1058, %v976
      %v1060 = vpop.permute.xlu0 %1059
      %1061 = vset.pattern.permute.xlu0 0
      %1062 = vperm.xlu0 %1061, %v977
      %v1063 = vpop.permute.xlu0 %1062
      %1064 = vset.pattern.permute.xlu0 0
      %1065 = vperm.xlu0 %1064, %v978
      %v1066 = vpop.permute.xlu0 %1065
      %1067 = vset.pattern.permute.xlu0 0
      %1068 = vperm.xlu0 %1067, %v979
      %v1069 = vpop.permute.xlu0 %1068
      %1070 = vset.pattern.permute.xlu0 0
      %1071 = vperm.xlu0 %1070, %v980
      %v1072 = vpop.permute.xlu0 %1071
      %1073 = vset.pattern.permute.xlu0 0
      %1074 = vperm.xlu0 %1073, %v981
      %v1075 = vpop.permute.xlu0 %1074
      %1076 = vset.pattern.permute.xlu0 0
      %1077 = vperm.xlu0 %1076, %v982
      %v1078 = vpop.permute.xlu0 %1077
      %1079 = vset.pattern.permute.xlu0 0
      %1080 = vperm.xlu0 %1079, %v983
      %v1081 = vpop.permute.xlu0 %1080
      %vm1082 = vcmp.eq.s32.totalorder %v985, %v988
      %vm1083 = vcmp.eq.s32.totalorder %v985, %v991
      %vm1084 = vcmp.eq.s32.totalorder %v985, %v994
      %vm1085 = vcmp.eq.s32.totalorder %v985, %v997
      %vm1086 = vcmp.eq.s32.totalorder %v985, %v1000
      %vm1087 = vcmp.eq.s32.totalorder %v985, %v1003
      %vm1088 = vcmp.eq.s32.totalorder %v985, %v1006
      %vm1089 = vcmp.eq.s32.totalorder %v985, %v1009
      %vm1090 = vcmp.eq.s32.totalorder %v985, %v1012
      %vm1091 = vcmp.eq.s32.totalorder %v985, %v1015
      %vm1092 = vcmp.eq.s32.totalorder %v985, %v1018
      %vm1093 = vcmp.eq.s32.totalorder %v985, %v1021
      %vm1094 = vcmp.eq.s32.totalorder %v985, %v1024
      %vm1095 = vcmp.eq.s32.totalorder %v985, %v1027
      %vm1096 = vcmp.eq.s32.totalorder %v985, %v1030
      %vm1097 = vcmp.eq.s32.totalorder %v985, %v1033
      %vm1098 = vcmp.eq.s32.totalorder %v985, %v1036
      %vm1099 = vcmp.eq.s32.totalorder %v985, %v1039
      %vm1100 = vcmp.eq.s32.totalorder %v985, %v1042
      %vm1101 = vcmp.eq.s32.totalorder %v985, %v1045
      %vm1102 = vcmp.eq.s32.totalorder %v985, %v1048
      %vm1103 = vcmp.eq.s32.totalorder %v985, %v1051
      %vm1104 = vcmp.eq.s32.totalorder %v985, %v1054
      %vm1105 = vcmp.eq.s32.totalorder %v985, %v1057
      %vm1106 = vcmp.eq.s32.totalorder %v985, %v1060
      %vm1107 = vcmp.eq.s32.totalorder %v985, %v1063
      %vm1108 = vcmp.eq.s32.totalorder %v985, %v1066
      %vm1109 = vcmp.eq.s32.totalorder %v985, %v1069
      %vm1110 = vcmp.eq.s32.totalorder %v985, %v1072
      %vm1111 = vcmp.eq.s32.totalorder %v985, %v1075
      %vm1112 = vcmp.eq.s32.totalorder %v985, %v1078
      %vm1113 = vcmp.eq.s32.totalorder %v985, %v1081
      %1114 = vset.pattern.permute.xlu0 1
      %1115 = vperm.xlu0 %1114, %v952
      %v1116 = vpop.permute.xlu0 %1115
      %1117 = vset.pattern.permute.xlu0 1
      %1118 = vperm.xlu0 %1117, %v953
      %v1119 = vpop.permute.xlu0 %1118
      %1120 = vset.pattern.permute.xlu0 1
      %1121 = vperm.xlu0 %1120, %v954
      %v1122 = vpop.permute.xlu0 %1121
      %1123 = vset.pattern.permute.xlu0 1
      %1124 = vperm.xlu0 %1123, %v955
      %v1125 = vpop.permute.xlu0 %1124
      %1126 = vset.pattern.permute.xlu0 1
      %1127 = vperm.xlu0 %1126, %v956
      %v1128 = vpop.permute.xlu0 %1127
      %1129 = vset.pattern.permute.xlu0 1
      %1130 = vperm.xlu0 %1129, %v957
      %v1131 = vpop.permute.xlu0 %1130
      %1132 = vset.pattern.permute.xlu0 1
      %1133 = vperm.xlu0 %1132, %v958
      %v1134 = vpop.permute.xlu0 %1133
      %1135 = vset.pattern.permute.xlu0 1
      %1136 = vperm.xlu0 %1135, %v959
      %v1137 = vpop.permute.xlu0 %1136
      %1138 = vset.pattern.permute.xlu0 1
      %1139 = vperm.xlu0 %1138, %v960
      %v1140 = vpop.permute.xlu0 %1139
      %1141 = vset.pattern.permute.xlu0 1
      %1142 = vperm.xlu0 %1141, %v961
      %v1143 = vpop.permute.xlu0 %1142
      %1144 = vset.pattern.permute.xlu0 1
      %1145 = vperm.xlu0 %1144, %v962
      %v1146 = vpop.permute.xlu0 %1145
      %1147 = vset.pattern.permute.xlu0 1
      %1148 = vperm.xlu0 %1147, %v963
      %v1149 = vpop.permute.xlu0 %1148
      %1150 = vset.pattern.permute.xlu0 1
      %1151 = vperm.xlu0 %1150, %v964
      %v1152 = vpop.permute.xlu0 %1151
      %1153 = vset.pattern.permute.xlu0 1
      %1154 = vperm.xlu0 %1153, %v965
      %v1155 = vpop.permute.xlu0 %1154
      %1156 = vset.pattern.permute.xlu0 1
      %1157 = vperm.xlu0 %1156, %v966
      %v1158 = vpop.permute.xlu0 %1157
      %1159 = vset.pattern.permute.xlu0 1
      %1160 = vperm.xlu0 %1159, %v967
      %v1161 = vpop.permute.xlu0 %1160
      %1162 = vset.pattern.permute.xlu0 1
      %1163 = vperm.xlu0 %1162, %v968
      %v1164 = vpop.permute.xlu0 %1163
      %1165 = vset.pattern.permute.xlu0 1
      %1166 = vperm.xlu0 %1165, %v969
      %v1167 = vpop.permute.xlu0 %1166
      %1168 = vset.pattern.permute.xlu0 1
      %1169 = vperm.xlu0 %1168, %v970
      %v1170 = vpop.permute.xlu0 %1169
      %1171 = vset.pattern.permute.xlu0 1
      %1172 = vperm.xlu0 %1171, %v971
      %v1173 = vpop.permute.xlu0 %1172
      %1174 = vset.pattern.permute.xlu0 1
      %1175 = vperm.xlu0 %1174, %v972
      %v1176 = vpop.permute.xlu0 %1175
      %1177 = vset.pattern.permute.xlu0 1
      %1178 = vperm.xlu0 %1177, %v973
      %v1179 = vpop.permute.xlu0 %1178
      %1180 = vset.pattern.permute.xlu0 1
      %1181 = vperm.xlu0 %1180, %v974
      %v1182 = vpop.permute.xlu0 %1181
      %1183 = vset.pattern.permute.xlu0 1
      %1184 = vperm.xlu0 %1183, %v975
      %v1185 = vpop.permute.xlu0 %1184
      %1186 = vset.pattern.permute.xlu0 1
      %1187 = vperm.xlu0 %1186, %v976
      %v1188 = vpop.permute.xlu0 %1187
      %1189 = vset.pattern.permute.xlu0 1
      %1190 = vperm.xlu0 %1189, %v977
      %v1191 = vpop.permute.xlu0 %1190
      %1192 = vset.pattern.permute.xlu0 1
      %1193 = vperm.xlu0 %1192, %v978
      %v1194 = vpop.permute.xlu0 %1193
      %1195 = vset.pattern.permute.xlu0 1
      %1196 = vperm.xlu0 %1195, %v979
      %v1197 = vpop.permute.xlu0 %1196
      %1198 = vset.pattern.permute.xlu0 1
      %1199 = vperm.xlu0 %1198, %v980
      %v1200 = vpop.permute.xlu0 %1199
      %1201 = vset.pattern.permute.xlu0 1
      %1202 = vperm.xlu0 %1201, %v981
      %v1203 = vpop.permute.xlu0 %1202
      %1204 = vset.pattern.permute.xlu0 1
      %1205 = vperm.xlu0 %1204, %v982
      %v1206 = vpop.permute.xlu0 %1205
      %1207 = vset.pattern.permute.xlu0 1
      %1208 = vperm.xlu0 %1207, %v983
      %v1209 = vpop.permute.xlu0 %1208
      %vm1210 = vcmp.eq.s32.totalorder %v985, %v1116
      %vm1211 = vcmp.eq.s32.totalorder %v985, %v1119
      %vm1212 = vcmp.eq.s32.totalorder %v985, %v1122
      %vm1213 = vcmp.eq.s32.totalorder %v985, %v1125
      %vm1214 = vcmp.eq.s32.totalorder %v985, %v1128
      %vm1215 = vcmp.eq.s32.totalorder %v985, %v1131
      %vm1216 = vcmp.eq.s32.totalorder %v985, %v1134
      %vm1217 = vcmp.eq.s32.totalorder %v985, %v1137
      %vm1218 = vcmp.eq.s32.totalorder %v985, %v1140
      %vm1219 = vcmp.eq.s32.totalorder %v985, %v1143
      %vm1220 = vcmp.eq.s32.totalorder %v985, %v1146
      %vm1221 = vcmp.eq.s32.totalorder %v985, %v1149
      %vm1222 = vcmp.eq.s32.totalorder %v985, %v1152
      %vm1223 = vcmp.eq.s32.totalorder %v985, %v1155
      %vm1224 = vcmp.eq.s32.totalorder %v985, %v1158
      %vm1225 = vcmp.eq.s32.totalorder %v985, %v1161
      %vm1226 = vcmp.eq.s32.totalorder %v985, %v1164
      %vm1227 = vcmp.eq.s32.totalorder %v985, %v1167
      %vm1228 = vcmp.eq.s32.totalorder %v985, %v1170
      %vm1229 = vcmp.eq.s32.totalorder %v985, %v1173
      %vm1230 = vcmp.eq.s32.totalorder %v985, %v1176
      %vm1231 = vcmp.eq.s32.totalorder %v985, %v1179
      %vm1232 = vcmp.eq.s32.totalorder %v985, %v1182
      %vm1233 = vcmp.eq.s32.totalorder %v985, %v1185
      %vm1234 = vcmp.eq.s32.totalorder %v985, %v1188
      %vm1235 = vcmp.eq.s32.totalorder %v985, %v1191
      %vm1236 = vcmp.eq.s32.totalorder %v985, %v1194
      %vm1237 = vcmp.eq.s32.totalorder %v985, %v1197
      %vm1238 = vcmp.eq.s32.totalorder %v985, %v1200
      %vm1239 = vcmp.eq.s32.totalorder %v985, %v1203
      %vm1240 = vcmp.eq.s32.totalorder %v985, %v1206
      %vm1241 = vcmp.eq.s32.totalorder %v985, %v1209
      %v1242 = vlaneseq
      %v1243 = vshrl.u32 %v1242, 7
      %v1244 = vadd.s32 %v1243, 8
      %v1245 = vadd.s32 %v1243, 16
      %v1246 = vadd.s32 %v1243, 24
      %v1247 = vadd.s32 %v1243, 32
      %v1248 = vadd.s32 %v1243, 40
      %v1249 = vadd.s32 %v1243, 48
      %v1250 = vadd.s32 %v1243, 56
      %v1251 = vadd.s32 %v1243, 64
      %v1252 = vadd.s32 %v1243, 72
      %v1253 = vadd.s32 %v1243, 80
      %v1254 = vadd.s32 %v1243, 88
      %v1255 = vadd.s32 %v1243, 96
      %v1256 = vadd.s32 %v1243, 104
      %v1257 = vadd.s32 %v1243, 112
      %v1258 = vadd.s32 %v1243, 120
      %v1259 = vadd.s32 %v1243, 128
      %v1260 = vadd.s32 %v1243, 136
      %v1261 = vadd.s32 %v1243, 144
      %v1262 = vadd.s32 %v1243, 152
      %v1263 = vadd.s32 %v1243, 160
      %v1264 = vadd.s32 %v1243, 168
      %v1265 = vadd.s32 %v1243, 176
      %v1266 = vadd.s32 %v1243, 184
      %v1267 = vadd.s32 %v1243, 192
      %v1268 = vadd.s32 %v1243, 200
      %v1269 = vadd.s32 %v1243, 208
      %v1270 = vadd.s32 %v1243, 216
      %v1271 = vadd.s32 %v1243, 224
      %v1272 = vadd.s32 %v1243, 232
      %v1273 = vadd.s32 %v1243, 240
      %v1274 = vadd.s32 %v1243, 248
      %v1275 = vstv %s185
      %v1276 = vadd.s32 %v1275, %v1243
      %v1277 = vadd.s32 %v1275, %v1244
      %v1278 = vadd.s32 %v1275, %v1245
      %v1279 = vadd.s32 %v1275, %v1246
      %v1280 = vadd.s32 %v1275, %v1247
      %v1281 = vadd.s32 %v1275, %v1248
      %v1282 = vadd.s32 %v1275, %v1249
      %v1283 = vadd.s32 %v1275, %v1250
      %v1284 = vadd.s32 %v1275, %v1251
      %v1285 = vadd.s32 %v1275, %v1252
      %v1286 = vadd.s32 %v1275, %v1253
      %v1287 = vadd.s32 %v1275, %v1254
      %v1288 = vadd.s32 %v1275, %v1255
      %v1289 = vadd.s32 %v1275, %v1256
      %v1290 = vadd.s32 %v1275, %v1257
      %v1291 = vadd.s32 %v1275, %v1258
      %v1292 = vadd.s32 %v1275, %v1259
      %v1293 = vadd.s32 %v1275, %v1260
      %v1294 = vadd.s32 %v1275, %v1261
      %v1295 = vadd.s32 %v1275, %v1262
      %v1296 = vadd.s32 %v1275, %v1263
      %v1297 = vadd.s32 %v1275, %v1264
      %v1298 = vadd.s32 %v1275, %v1265
      %v1299 = vadd.s32 %v1275, %v1266
      %v1300 = vadd.s32 %v1275, %v1267
      %v1301 = vadd.s32 %v1275, %v1268
      %v1302 = vadd.s32 %v1275, %v1269
      %v1303 = vadd.s32 %v1275, %v1270
      %v1304 = vadd.s32 %v1275, %v1271
      %v1305 = vadd.s32 %v1275, %v1272
      %v1306 = vadd.s32 %v1275, %v1273
      %v1307 = vadd.s32 %v1275, %v1274
      %vm1308 = vcmp.lt.s32.totalorder %v1276, 256
      %vm1309 = vcmp.lt.s32.totalorder %v1277, 256
      %vm1310 = vcmp.lt.s32.totalorder %v1278, 256
      %vm1311 = vcmp.lt.s32.totalorder %v1279, 256
      %vm1312 = vcmp.lt.s32.totalorder %v1280, 256
      %vm1313 = vcmp.lt.s32.totalorder %v1281, 256
      %vm1314 = vcmp.lt.s32.totalorder %v1282, 256
      %vm1315 = vcmp.lt.s32.totalorder %v1283, 256
      %vm1316 = vcmp.lt.s32.totalorder %v1284, 256
      %vm1317 = vcmp.lt.s32.totalorder %v1285, 256
      %vm1318 = vcmp.lt.s32.totalorder %v1286, 256
      %vm1319 = vcmp.lt.s32.totalorder %v1287, 256
      %vm1320 = vcmp.lt.s32.totalorder %v1288, 256
      %vm1321 = vcmp.lt.s32.totalorder %v1289, 256
      %vm1322 = vcmp.lt.s32.totalorder %v1290, 256
      %vm1323 = vcmp.lt.s32.totalorder %v1291, 256
      %vm1324 = vcmp.lt.s32.totalorder %v1292, 256
      %vm1325 = vcmp.lt.s32.totalorder %v1293, 256
      %vm1326 = vcmp.lt.s32.totalorder %v1294, 256
      %vm1327 = vcmp.lt.s32.totalorder %v1295, 256
      %vm1328 = vcmp.lt.s32.totalorder %v1296, 256
      %vm1329 = vcmp.lt.s32.totalorder %v1297, 256
      %vm1330 = vcmp.lt.s32.totalorder %v1298, 256
      %vm1331 = vcmp.lt.s32.totalorder %v1299, 256
      %vm1332 = vcmp.lt.s32.totalorder %v1300, 256
      %vm1333 = vcmp.lt.s32.totalorder %v1301, 256
      %vm1334 = vcmp.lt.s32.totalorder %v1302, 256
      %vm1335 = vcmp.lt.s32.totalorder %v1303, 256
      %vm1336 = vcmp.lt.s32.totalorder %v1304, 256
      %vm1337 = vcmp.lt.s32.totalorder %v1305, 256
      %vm1338 = vcmp.lt.s32.totalorder %v1306, 256
      %vm1339 = vcmp.lt.s32.totalorder %v1307, 256
      %v1340 = vsel %vm1308, 1, 0
      %v1341 = vsel %vm1309, 1, 0
      %v1342 = vsel %vm1310, 1, 0
      %v1343 = vsel %vm1311, 1, 0
      %v1344 = vsel %vm1312, 1, 0
      %v1345 = vsel %vm1313, 1, 0
      %v1346 = vsel %vm1314, 1, 0
      %v1347 = vsel %vm1315, 1, 0
      %v1348 = vsel %vm1316, 1, 0
      %v1349 = vsel %vm1317, 1, 0
      %v1350 = vsel %vm1318, 1, 0
      %v1351 = vsel %vm1319, 1, 0
      %v1352 = vsel %vm1320, 1, 0
      %v1353 = vsel %vm1321, 1, 0
      %v1354 = vsel %vm1322, 1, 0
      %v1355 = vsel %vm1323, 1, 0
      %v1356 = vsel %vm1324, 1, 0
      %v1357 = vsel %vm1325, 1, 0
      %v1358 = vsel %vm1326, 1, 0
      %v1359 = vsel %vm1327, 1, 0
      %v1360 = vsel %vm1328, 1, 0
      %v1361 = vsel %vm1329, 1, 0
      %v1362 = vsel %vm1330, 1, 0
      %v1363 = vsel %vm1331, 1, 0
      %v1364 = vsel %vm1332, 1, 0
      %v1365 = vsel %vm1333, 1, 0
      %v1366 = vsel %vm1334, 1, 0
      %v1367 = vsel %vm1335, 1, 0
      %v1368 = vsel %vm1336, 1, 0
      %v1369 = vsel %vm1337, 1, 0
      %v1370 = vsel %vm1338, 1, 0
      %v1371 = vsel %vm1339, 1, 0
      %vm1372 = vcmp.eq.s32.totalorder %v1340, 1
      %vm1373 = vcmp.eq.s32.totalorder %v1341, 1
      %vm1374 = vcmp.eq.s32.totalorder %v1342, 1
      %vm1375 = vcmp.eq.s32.totalorder %v1343, 1
      %vm1376 = vcmp.eq.s32.totalorder %v1344, 1
      %vm1377 = vcmp.eq.s32.totalorder %v1345, 1
      %vm1378 = vcmp.eq.s32.totalorder %v1346, 1
      %vm1379 = vcmp.eq.s32.totalorder %v1347, 1
      %vm1380 = vcmp.eq.s32.totalorder %v1348, 1
      %vm1381 = vcmp.eq.s32.totalorder %v1349, 1
      %vm1382 = vcmp.eq.s32.totalorder %v1350, 1
      %vm1383 = vcmp.eq.s32.totalorder %v1351, 1
      %vm1384 = vcmp.eq.s32.totalorder %v1352, 1
      %vm1385 = vcmp.eq.s32.totalorder %v1353, 1
      %vm1386 = vcmp.eq.s32.totalorder %v1354, 1
      %vm1387 = vcmp.eq.s32.totalorder %v1355, 1
      %vm1388 = vcmp.eq.s32.totalorder %v1356, 1
      %vm1389 = vcmp.eq.s32.totalorder %v1357, 1
      %vm1390 = vcmp.eq.s32.totalorder %v1358, 1
      %vm1391 = vcmp.eq.s32.totalorder %v1359, 1
      %vm1392 = vcmp.eq.s32.totalorder %v1360, 1
      %vm1393 = vcmp.eq.s32.totalorder %v1361, 1
      %vm1394 = vcmp.eq.s32.totalorder %v1362, 1
      %vm1395 = vcmp.eq.s32.totalorder %v1363, 1
      %vm1396 = vcmp.eq.s32.totalorder %v1364, 1
      %vm1397 = vcmp.eq.s32.totalorder %v1365, 1
      %vm1398 = vcmp.eq.s32.totalorder %v1366, 1
      %vm1399 = vcmp.eq.s32.totalorder %v1367, 1
      %vm1400 = vcmp.eq.s32.totalorder %v1368, 1
      %vm1401 = vcmp.eq.s32.totalorder %v1369, 1
      %vm1402 = vcmp.eq.s32.totalorder %v1370, 1
      %vm1403 = vcmp.eq.s32.totalorder %v1371, 1
      %vm1404 = vmand %vm1082, %vm1372
      %vm1405 = vmand %vm1083, %vm1373
      %vm1406 = vmand %vm1084, %vm1374
      %vm1407 = vmand %vm1085, %vm1375
      %vm1408 = vmand %vm1086, %vm1376
      %vm1409 = vmand %vm1087, %vm1377
      %vm1410 = vmand %vm1088, %vm1378
      %vm1411 = vmand %vm1089, %vm1379
      %vm1412 = vmand %vm1090, %vm1380
      %vm1413 = vmand %vm1091, %vm1381
      %vm1414 = vmand %vm1092, %vm1382
      %vm1415 = vmand %vm1093, %vm1383
      %vm1416 = vmand %vm1094, %vm1384
      %vm1417 = vmand %vm1095, %vm1385
      %vm1418 = vmand %vm1096, %vm1386
      %vm1419 = vmand %vm1097, %vm1387
      %vm1420 = vmand %vm1098, %vm1388
      %vm1421 = vmand %vm1099, %vm1389
      %vm1422 = vmand %vm1100, %vm1390
      %vm1423 = vmand %vm1101, %vm1391
      %vm1424 = vmand %vm1102, %vm1392
      %vm1425 = vmand %vm1103, %vm1393
      %vm1426 = vmand %vm1104, %vm1394
      %vm1427 = vmand %vm1105, %vm1395
      %vm1428 = vmand %vm1106, %vm1396
      %vm1429 = vmand %vm1107, %vm1397
      %vm1430 = vmand %vm1108, %vm1398
      %vm1431 = vmand %vm1109, %vm1399
      %vm1432 = vmand %vm1110, %vm1400
      %vm1433 = vmand %vm1111, %vm1401
      %vm1434 = vmand %vm1112, %vm1402
      %vm1435 = vmand %vm1113, %vm1403
      %vm1436 = vmand %vm1210, %vm1372
      %vm1437 = vmand %vm1211, %vm1373
      %vm1438 = vmand %vm1212, %vm1374
      %vm1439 = vmand %vm1213, %vm1375
      %vm1440 = vmand %vm1214, %vm1376
      %vm1441 = vmand %vm1215, %vm1377
      %vm1442 = vmand %vm1216, %vm1378
      %vm1443 = vmand %vm1217, %vm1379
      %vm1444 = vmand %vm1218, %vm1380
      %vm1445 = vmand %vm1219, %vm1381
      %vm1446 = vmand %vm1220, %vm1382
      %vm1447 = vmand %vm1221, %vm1383
      %vm1448 = vmand %vm1222, %vm1384
      %vm1449 = vmand %vm1223, %vm1385
      %vm1450 = vmand %vm1224, %vm1386
      %vm1451 = vmand %vm1225, %vm1387
      %vm1452 = vmand %vm1226, %vm1388
      %vm1453 = vmand %vm1227, %vm1389
      %vm1454 = vmand %vm1228, %vm1390
      %vm1455 = vmand %vm1229, %vm1391
      %vm1456 = vmand %vm1230, %vm1392
      %vm1457 = vmand %vm1231, %vm1393
      %vm1458 = vmand %vm1232, %vm1394
      %vm1459 = vmand %vm1233, %vm1395
      %vm1460 = vmand %vm1234, %vm1396
      %vm1461 = vmand %vm1235, %vm1397
      %vm1462 = vmand %vm1236, %vm1398
      %vm1463 = vmand %vm1237, %vm1399
      %vm1464 = vmand %vm1238, %vm1400
      %vm1465 = vmand %vm1239, %vm1401
      %vm1466 = vmand %vm1240, %vm1402
      %vm1467 = vmand %vm1241, %vm1403
      %v1468 = vld [vmem:[#allocation2] sm:$0x1]
      %v1469 = vsel %vm1404, %v887, 0.0
      %v1470 = vsel %vm1405, %v888, 0.0
      %v1471 = vsel %vm1406, %v889, 0.0
      %v1472 = vsel %vm1407, %v890, 0.0
      %v1473 = vsel %vm1408, %v891, 0.0
      %v1474 = vsel %vm1409, %v892, 0.0
      %v1475 = vsel %vm1410, %v893, 0.0
      %v1476 = vsel %vm1411, %v894, 0.0
      %v1477 = vsel %vm1412, %v895, 0.0
      %v1478 = vsel %vm1413, %v896, 0.0
      %v1479 = vsel %vm1414, %v897, 0.0
      %v1480 = vsel %vm1415, %v898, 0.0
      %v1481 = vsel %vm1416, %v899, 0.0
      %v1482 = vsel %vm1417, %v900, 0.0
      %v1483 = vsel %vm1418, %v901, 0.0
      %v1484 = vsel %vm1419, %v902, 0.0
      %v1485 = vsel %vm1420, %v903, 0.0
      %v1486 = vsel %vm1421, %v904, 0.0
      %v1487 = vsel %vm1422, %v905, 0.0
      %v1488 = vsel %vm1423, %v906, 0.0
      %v1489 = vsel %vm1424, %v907, 0.0
      %v1490 = vsel %vm1425, %v908, 0.0
      %v1491 = vsel %vm1426, %v909, 0.0
      %v1492 = vsel %vm1427, %v910, 0.0
      %v1493 = vsel %vm1428, %v911, 0.0
      %v1494 = vsel %vm1429, %v912, 0.0
      %v1495 = vsel %vm1430, %v913, 0.0
      %v1496 = vsel %vm1431, %v914, 0.0
      %v1497 = vsel %vm1432, %v915, 0.0
      %v1498 = vsel %vm1433, %v916, 0.0
      %v1499 = vsel %vm1434, %v917, 0.0
      %v1500 = vsel %vm1435, %v918, 0.0
      %vm1501 = vcmask 105472
      %v1502 = vsel %vm1501, %v1469, 0.0
      %v1503 = vsel %vm1501, %v1470, 0.0
      %v1504 = vadd.f32 %v1502, %v1503
      %v1505 = vsel %vm1501, %v1471, 0.0
      %v1506 = vadd.f32 %v1504, %v1505
      %v1507 = vsel %vm1501, %v1472, 0.0
      %v1508 = vadd.f32 %v1506, %v1507
      %v1509 = vsel %vm1501, %v1473, 0.0
      %v1510 = vadd.f32 %v1508, %v1509
      %v1511 = vsel %vm1501, %v1474, 0.0
      %v1512 = vadd.f32 %v1510, %v1511
      %v1513 = vsel %vm1501, %v1475, 0.0
      %v1514 = vadd.f32 %v1512, %v1513
      %v1515 = vsel %vm1501, %v1476, 0.0
      %v1516 = vadd.f32 %v1514, %v1515
      %v1517 = vsel %vm1501, %v1477, 0.0
      %v1518 = vadd.f32 %v1516, %v1517
      %v1519 = vsel %vm1501, %v1478, 0.0
      %v1520 = vadd.f32 %v1518, %v1519
      %v1521 = vsel %vm1501, %v1479, 0.0
      %v1522 = vadd.f32 %v1520, %v1521
      %v1523 = vsel %vm1501, %v1480, 0.0
      %v1524 = vadd.f32 %v1522, %v1523
      %v1525 = vsel %vm1501, %v1481, 0.0
      %v1526 = vadd.f32 %v1524, %v1525
      %v1527 = vsel %vm1501, %v1482, 0.0
      %v1528 = vadd.f32 %v1526, %v1527
      %v1529 = vsel %vm1501, %v1483, 0.0
      %v1530 = vadd.f32 %v1528, %v1529
      %v1531 = vsel %vm1501, %v1484, 0.0
      %v1532 = vadd.f32 %v1530, %v1531
      %v1533 = vsel %vm1501, %v1485, 0.0
      %v1534 = vadd.f32 %v1532, %v1533
      %v1535 = vsel %vm1501, %v1486, 0.0
      %v1536 = vadd.f32 %v1534, %v1535
      %v1537 = vsel %vm1501, %v1487, 0.0
      %v1538 = vadd.f32 %v1536, %v1537
      %v1539 = vsel %vm1501, %v1488, 0.0
      %v1540 = vadd.f32 %v1538, %v1539
      %v1541 = vsel %vm1501, %v1489, 0.0
      %v1542 = vadd.f32 %v1540, %v1541
      %v1543 = vsel %vm1501, %v1490, 0.0
      %v1544 = vadd.f32 %v1542, %v1543
      %v1545 = vsel %vm1501, %v1491, 0.0
      %v1546 = vadd.f32 %v1544, %v1545
      %v1547 = vsel %vm1501, %v1492, 0.0
      %v1548 = vadd.f32 %v1546, %v1547
      %v1549 = vsel %vm1501, %v1493, 0.0
      %v1550 = vadd.f32 %v1548, %v1549
      %v1551 = vsel %vm1501, %v1494, 0.0
      %v1552 = vadd.f32 %v1550, %v1551
      %v1553 = vsel %vm1501, %v1495, 0.0
      %v1554 = vadd.f32 %v1552, %v1553
      %v1555 = vsel %vm1501, %v1496, 0.0
      %v1556 = vadd.f32 %v1554, %v1555
      %v1557 = vsel %vm1501, %v1497, 0.0
      %v1558 = vadd.f32 %v1556, %v1557
      %v1559 = vsel %vm1501, %v1498, 0.0
      %v1560 = vadd.f32 %v1558, %v1559
      %v1561 = vsel %vm1501, %v1499, 0.0
      %v1562 = vadd.f32 %v1560, %v1561
      %v1563 = vsel %vm1501, %v1500, 0.0
      %v1564 = vadd.f32 %v1562, %v1563
      %v1565 = vrot.slane %v1564, 4
      %v1566 = vadd.f32 %v1564, %v1565
      %v1567 = vrot.slane %v1566, 2
      %v1568 = vadd.f32 %v1566, %v1567
      %v1569 = vrot.slane %v1568, 1
      %v1570 = vadd.f32 %v1568, %v1569
      %v1571 = vadd.f32 %v1468, %v1570
      %vm1572 = vcmask 98304
      %1573 = vst.msk [vmem:[#allocation2] sm:$0x1] %vm1572, %v1571
      %v1575 = vlaneseq
      %v1576 = vshrl.u32 %v1575, 7
      %v1577 = vsub.s32 0, %v1576
      %v1578 = vrot.slane %v951, %v1577
      %v1580 = vsel %vm1436, %v1578, 0.0
      %v1581 = vsel %vm1437, %v1578, 0.0
      %v1582 = vsel %vm1438, %v1578, 0.0
      %v1583 = vsel %vm1439, %v1578, 0.0
      %v1584 = vsel %vm1440, %v1578, 0.0
      %v1585 = vsel %vm1441, %v1578, 0.0
      %v1586 = vsel %vm1442, %v1578, 0.0
      %v1587 = vsel %vm1443, %v1578, 0.0
      %v1588 = vsel %vm1444, %v1578, 0.0
      %v1589 = vsel %vm1445, %v1578, 0.0
      %v1590 = vsel %vm1446, %v1578, 0.0
      %v1591 = vsel %vm1447, %v1578, 0.0
      %v1592 = vsel %vm1448, %v1578, 0.0
      %v1593 = vsel %vm1449, %v1578, 0.0
      %v1594 = vsel %vm1450, %v1578, 0.0
      %v1595 = vsel %vm1451, %v1578, 0.0
      %v1596 = vsel %vm1452, %v1578, 0.0
      %v1597 = vsel %vm1453, %v1578, 0.0
      %v1598 = vsel %vm1454, %v1578, 0.0
      %v1599 = vsel %vm1455, %v1578, 0.0
      %v1600 = vsel %vm1456, %v1578, 0.0
      %v1601 = vsel %vm1457, %v1578, 0.0
      %v1602 = vsel %vm1458, %v1578, 0.0
      %v1603 = vsel %vm1459, %v1578, 0.0
      %v1604 = vsel %vm1460, %v1578, 0.0
      %v1605 = vsel %vm1461, %v1578, 0.0
      %v1606 = vsel %vm1462, %v1578, 0.0
      %v1607 = vsel %vm1463, %v1578, 0.0
      %v1608 = vsel %vm1464, %v1578, 0.0
      %v1609 = vsel %vm1465, %v1578, 0.0
      %v1610 = vsel %vm1466, %v1578, 0.0
      %v1611 = vsel %vm1467, %v1578, 0.0
      %v1612 = vmul.f32 %v1578, %v919
      %v1613 = vmul.f32 %v1578, %v920
      %v1614 = vmul.f32 %v1578, %v921
      %v1615 = vmul.f32 %v1578, %v922
      %v1616 = vmul.f32 %v1578, %v923
      %v1617 = vmul.f32 %v1578, %v924
      %v1618 = vmul.f32 %v1578, %v925
      %v1619 = vmul.f32 %v1578, %v926
      %v1620 = vmul.f32 %v1578, %v927
      %v1621 = vmul.f32 %v1578, %v928
      %v1622 = vmul.f32 %v1578, %v929
      %v1623 = vmul.f32 %v1578, %v930
      %v1624 = vmul.f32 %v1578, %v931
      %v1625 = vmul.f32 %v1578, %v932
      %v1626 = vmul.f32 %v1578, %v933
      %v1627 = vmul.f32 %v1578, %v934
      %v1628 = vmul.f32 %v1578, %v935
      %v1629 = vmul.f32 %v1578, %v936
      %v1630 = vmul.f32 %v1578, %v937
      %v1631 = vmul.f32 %v1578, %v938
      %v1632 = vmul.f32 %v1578, %v939
      %v1633 = vmul.f32 %v1578, %v940
      %v1634 = vmul.f32 %v1578, %v941
      %v1635 = vmul.f32 %v1578, %v942
      %v1636 = vmul.f32 %v1578, %v943
      %v1637 = vmul.f32 %v1578, %v944
      %v1638 = vmul.f32 %v1578, %v945
      %v1639 = vmul.f32 %v1578, %v946
      %v1640 = vmul.f32 %v1578, %v947
      %v1641 = vmul.f32 %v1578, %v948
      %v1642 = vmul.f32 %v1578, %v949
      %v1643 = vmul.f32 %v1578, %v950
      %v1644 = vsel %vm1436, %v1612, 0.0
      %v1645 = vsel %vm1437, %v1613, 0.0
      %v1646 = vsel %vm1438, %v1614, 0.0
      %v1647 = vsel %vm1439, %v1615, 0.0
      %v1648 = vsel %vm1440, %v1616, 0.0
      %v1649 = vsel %vm1441, %v1617, 0.0
      %v1650 = vsel %vm1442, %v1618, 0.0
      %v1651 = vsel %vm1443, %v1619, 0.0
      %v1652 = vsel %vm1444, %v1620, 0.0
      %v1653 = vsel %vm1445, %v1621, 0.0
      %v1654 = vsel %vm1446, %v1622, 0.0
      %v1655 = vsel %vm1447, %v1623, 0.0
      %v1656 = vsel %vm1448, %v1624, 0.0
      %v1657 = vsel %vm1449, %v1625, 0.0
      %v1658 = vsel %vm1450, %v1626, 0.0
      %v1659 = vsel %vm1451, %v1627, 0.0
      %v1660 = vsel %vm1452, %v1628, 0.0
      %v1661 = vsel %vm1453, %v1629, 0.0
      %v1662 = vsel %vm1454, %v1630, 0.0
      %v1663 = vsel %vm1455, %v1631, 0.0
      %v1664 = vsel %vm1456, %v1632, 0.0
      %v1665 = vsel %vm1457, %v1633, 0.0
      %v1666 = vsel %vm1458, %v1634, 0.0
      %v1667 = vsel %vm1459, %v1635, 0.0
      %v1668 = vsel %vm1460, %v1636, 0.0
      %v1669 = vsel %vm1461, %v1637, 0.0
      %v1670 = vsel %vm1462, %v1638, 0.0
      %v1671 = vsel %vm1463, %v1639, 0.0
      %v1672 = vsel %vm1464, %v1640, 0.0
      %v1673 = vsel %vm1465, %v1641, 0.0
      %v1674 = vsel %vm1466, %v1642, 0.0
      %v1675 = vsel %vm1467, %v1643, 0.0
      %v1676 = vld [vmem:[#allocation3] sm:$0x1]
      %vm1677 = vcmask 15360
      %v1678 = vsel %vm1677, %v1644, 0.0
      %v1679 = vsel %vm1677, %v1645, 0.0
      %v1680 = vadd.f32 %v1678, %v1679
      %v1681 = vsel %vm1677, %v1646, 0.0
      %v1682 = vadd.f32 %v1680, %v1681
      %v1683 = vsel %vm1677, %v1647, 0.0
      %v1684 = vadd.f32 %v1682, %v1683
      %v1685 = vsel %vm1677, %v1648, 0.0
      %v1686 = vadd.f32 %v1684, %v1685
      %v1687 = vsel %vm1677, %v1649, 0.0
      %v1688 = vadd.f32 %v1686, %v1687
      %v1689 = vsel %vm1677, %v1650, 0.0
      %v1690 = vadd.f32 %v1688, %v1689
      %v1691 = vsel %vm1677, %v1651, 0.0
      %v1692 = vadd.f32 %v1690, %v1691
      %v1693 = vsel %vm1677, %v1652, 0.0
      %v1694 = vadd.f32 %v1692, %v1693
      %v1695 = vsel %vm1677, %v1653, 0.0
      %v1696 = vadd.f32 %v1694, %v1695
      %v1697 = vsel %vm1677, %v1654, 0.0
      %v1698 = vadd.f32 %v1696, %v1697
      %v1699 = vsel %vm1677, %v1655, 0.0
      %v1700 = vadd.f32 %v1698, %v1699
      %v1701 = vsel %vm1677, %v1656, 0.0
      %v1702 = vadd.f32 %v1700, %v1701
      %v1703 = vsel %vm1677, %v1657, 0.0
      %v1704 = vadd.f32 %v1702, %v1703
      %v1705 = vsel %vm1677, %v1658, 0.0
      %v1706 = vadd.f32 %v1704, %v1705
      %v1707 = vsel %vm1677, %v1659, 0.0
      %v1708 = vadd.f32 %v1706, %v1707
      %v1709 = vsel %vm1677, %v1660, 0.0
      %v1710 = vadd.f32 %v1708, %v1709
      %v1711 = vsel %vm1677, %v1661, 0.0
      %v1712 = vadd.f32 %v1710, %v1711
      %v1713 = vsel %vm1677, %v1662, 0.0
      %v1714 = vadd.f32 %v1712, %v1713
      %v1715 = vsel %vm1677, %v1663, 0.0
      %v1716 = vadd.f32 %v1714, %v1715
      %v1717 = vsel %vm1677, %v1664, 0.0
      %v1718 = vadd.f32 %v1716, %v1717
      %v1719 = vsel %vm1677, %v1665, 0.0
      %v1720 = vadd.f32 %v1718, %v1719
      %v1721 = vsel %vm1677, %v1666, 0.0
      %v1722 = vadd.f32 %v1720, %v1721
      %v1723 = vsel %vm1677, %v1667, 0.0
      %v1724 = vadd.f32 %v1722, %v1723
      %v1725 = vsel %vm1677, %v1668, 0.0
      %v1726 = vadd.f32 %v1724, %v1725
      %v1727 = vsel %vm1677, %v1669, 0.0
      %v1728 = vadd.f32 %v1726, %v1727
      %v1729 = vsel %vm1677, %v1670, 0.0
      %v1730 = vadd.f32 %v1728, %v1729
      %v1731 = vsel %vm1677, %v1671, 0.0
      %v1732 = vadd.f32 %v1730, %v1731
      %v1733 = vsel %vm1677, %v1672, 0.0
      %v1734 = vadd.f32 %v1732, %v1733
      %v1735 = vsel %vm1677, %v1673, 0.0
      %v1736 = vadd.f32 %v1734, %v1735
      %v1737 = vsel %vm1677, %v1674, 0.0
      %v1738 = vadd.f32 %v1736, %v1737
      %v1739 = vsel %vm1677, %v1675, 0.0
      %v1740 = vadd.f32 %v1738, %v1739
      %v1741 = vrot.slane %v1740, 4
      %v1742 = vadd.f32 %v1740, %v1741
      %v1743 = vrot.slane %v1742, 2
      %v1744 = vadd.f32 %v1742, %v1743
      %v1745 = vrot.slane %v1744, 1
      %v1746 = vadd.f32 %v1744, %v1745
      %v1747 = vadd.f32 %v1676, %v1746
      %vm1748 = vcmask 8192
      %1749 = vst.msk [vmem:[#allocation3] sm:$0x1] %vm1748, %v1747
      %v1750 = vld [vmem:[#allocation4] sm:$0x1]
      %v1751 = vsel %vm1677, %v1580, 0.0
      %v1752 = vsel %vm1677, %v1581, 0.0
      %v1753 = vadd.f32 %v1751, %v1752
      %v1754 = vsel %vm1677, %v1582, 0.0
      %v1755 = vadd.f32 %v1753, %v1754
      %v1756 = vsel %vm1677, %v1583, 0.0
      %v1757 = vadd.f32 %v1755, %v1756
      %v1758 = vsel %vm1677, %v1584, 0.0
      %v1759 = vadd.f32 %v1757, %v1758
      %v1760 = vsel %vm1677, %v1585, 0.0
      %v1761 = vadd.f32 %v1759, %v1760
      %v1762 = vsel %vm1677, %v1586, 0.0
      %v1763 = vadd.f32 %v1761, %v1762
      %v1764 = vsel %vm1677, %v1587, 0.0
      %v1765 = vadd.f32 %v1763, %v1764
      %v1766 = vsel %vm1677, %v1588, 0.0
      %v1767 = vadd.f32 %v1765, %v1766
      %v1768 = vsel %vm1677, %v1589, 0.0
      %v1769 = vadd.f32 %v1767, %v1768
      %v1770 = vsel %vm1677, %v1590, 0.0
      %v1771 = vadd.f32 %v1769, %v1770
      %v1772 = vsel %vm1677, %v1591, 0.0
      %v1773 = vadd.f32 %v1771, %v1772
      %v1774 = vsel %vm1677, %v1592, 0.0
      %v1775 = vadd.f32 %v1773, %v1774
      %v1776 = vsel %vm1677, %v1593, 0.0
      %v1777 = vadd.f32 %v1775, %v1776
      %v1778 = vsel %vm1677, %v1594, 0.0
      %v1779 = vadd.f32 %v1777, %v1778
      %v1780 = vsel %vm1677, %v1595, 0.0
      %v1781 = vadd.f32 %v1779, %v1780
      %v1782 = vsel %vm1677, %v1596, 0.0
      %v1783 = vadd.f32 %v1781, %v1782
      %v1784 = vsel %vm1677, %v1597, 0.0
      %v1785 = vadd.f32 %v1783, %v1784
      %v1786 = vsel %vm1677, %v1598, 0.0
      %v1787 = vadd.f32 %v1785, %v1786
      %v1788 = vsel %vm1677, %v1599, 0.0
      %v1789 = vadd.f32 %v1787, %v1788
      %v1790 = vsel %vm1677, %v1600, 0.0
      %v1791 = vadd.f32 %v1789, %v1790
      %v1792 = vsel %vm1677, %v1601, 0.0
      %v1793 = vadd.f32 %v1791, %v1792
      %v1794 = vsel %vm1677, %v1602, 0.0
      %v1795 = vadd.f32 %v1793, %v1794
      %v1796 = vsel %vm1677, %v1603, 0.0
      %v1797 = vadd.f32 %v1795, %v1796
      %v1798 = vsel %vm1677, %v1604, 0.0
      %v1799 = vadd.f32 %v1797, %v1798
      %v1800 = vsel %vm1677, %v1605, 0.0
      %v1801 = vadd.f32 %v1799, %v1800
      %v1802 = vsel %vm1677, %v1606, 0.0
      %v1803 = vadd.f32 %v1801, %v1802
      %v1804 = vsel %vm1677, %v1607, 0.0
      %v1805 = vadd.f32 %v1803, %v1804
      %v1806 = vsel %vm1677, %v1608, 0.0
      %v1807 = vadd.f32 %v1805, %v1806
      %v1808 = vsel %vm1677, %v1609, 0.0
      %v1809 = vadd.f32 %v1807, %v1808
      %v1810 = vsel %vm1677, %v1610, 0.0
      %v1811 = vadd.f32 %v1809, %v1810
      %v1812 = vsel %vm1677, %v1611, 0.0
      %v1813 = vadd.f32 %v1811, %v1812
      %v1814 = vrot.slane %v1813, 4
      %v1815 = vadd.f32 %v1813, %v1814
      %v1816 = vrot.slane %v1815, 2
      %v1817 = vadd.f32 %v1815, %v1816
      %v1818 = vrot.slane %v1817, 1
      %v1819 = vadd.f32 %v1817, %v1818
      %v1820 = vadd.f32 %v1750, %v1819
      %1821 = vst.msk [vmem:[#allocation4] sm:$0x1] %vm1748, %v1820
      %v1822 = vld [vmem:[%s160] sm:$0xff]
      %v1823 = vld [vmem:[%s170] sm:$0xff]
      %v1824 = vsub.f32 %v1822, %v1823
      %v1825 = vld [vmem:[#allocation5] sm:$0x1]
      %v1826 = vmul.f32 %v1824, %v1824
      %v1827 = vrot.slane %v1826, 4
      %v1828 = vadd.f32 %v1826, %v1827
      %v1829 = vrot.slane %v1828, 2
      %v1830 = vadd.f32 %v1828, %v1829
      %v1831 = vrot.slane %v1830, 1
      %v1832 = vadd.f32 %v1830, %v1831
      %v1833 = vadd.f32 %v1825, %v1832
      %1834 = vst [vmem:[#allocation5] sm:$0x1] %v1833
    $region37: #{tpu_custom_call.1} parent=1 // pred_fallthru
      _
    // Predicated region
    $region38: #{tpu_custom_call.1} parent=1 // pred_check
      %p1835 = pneg %p174
    $region39: #{tpu_custom_call.1} parent=1 // pred_check_branch
      %1837 = sbr.rel (%p1835) target = $region41
    $region40: #{tpu_custom_call.1} parent=1 // pred_region
      %v1838 = vld [vmem:[#allocation2] sm:$0x1]
      %vm1839 = vcmask 98304
      %v1840 = vsel %vm1839, %v1838, 0.0
      %1841 = vadd.xlane.f32.xlu0 %v1840
      %v1842 = vpop.xlane.xlu0 %1841
      %v1843 = vrot.slane %v1842, 4
      %v1844 = vadd.f32 %v1842, %v1843
      %v1845 = vrot.slane %v1844, 2
      %v1846 = vadd.f32 %v1844, %v1845
      %v1847 = vrot.slane %v1846, 1
      %v1848 = vadd.f32 %v1846, %v1847
      %s1849 = vtos %v1848
      %v1850 = vld [vmem:[#allocation3] sm:$0x1]
      %vm1851 = vcmask 8192
      %v1852 = vsel %vm1851, %v1850, 0.0
      %1853 = vadd.xlane.f32.xlu0 %v1852
      %v1854 = vpop.xlane.xlu0 %1853
      %v1855 = vrot.slane %v1854, 4
      %v1856 = vadd.f32 %v1854, %v1855
      %v1857 = vrot.slane %v1856, 2
      %v1858 = vadd.f32 %v1856, %v1857
      %v1859 = vrot.slane %v1858, 1
      %v1860 = vadd.f32 %v1858, %v1859
      %s1861 = vtos %v1860
      %v1862 = vld [vmem:[#allocation4] sm:$0x1]
      %v1863 = vsel %vm1851, %v1862, 0.0
      %1864 = vadd.xlane.f32.xlu0 %v1863
      %v1865 = vpop.xlane.xlu0 %1864
      %v1866 = vrot.slane %v1865, 4
      %v1867 = vadd.f32 %v1865, %v1866
      %v1868 = vrot.slane %v1867, 2
      %v1869 = vadd.f32 %v1867, %v1868
      %v1870 = vrot.slane %v1869, 1
      %v1871 = vadd.f32 %v1869, %v1870
      %s1872 = vtos %v1871
      %v1873 = vld [vmem:[#allocation5] sm:$0x1]
      %vm1874 = vcmask 1040384
      %v1875 = vsel %vm1874, %v1873, 0.0
      %1876 = vadd.xlane.f32.xlu0 %v1875
      %v1877 = vpop.xlane.xlu0 %1876
      %v1878 = vrot.slane %v1877, 4
      %v1879 = vadd.f32 %v1877, %v1878
      %v1880 = vrot.slane %v1879, 2
      %v1881 = vadd.f32 %v1879, %v1880
      %v1882 = vrot.slane %v1881, 1
      %v1883 = vadd.f32 %v1881, %v1882
      %s1884 = vtos %v1883
      %v1885 = vlaneseq
      %v1886 = vand.u32 %v1885, 127
      %v1887 = vlaneseq
      %v1888 = vshrl.u32 %v1887, 7
      %vm1889 = vcmp.eq.s32.totalorder %v1888, 0
      %vm1890 = vcmp.eq.s32.totalorder %v1886, 0
      %vm1891 = vmand %vm1889, %vm1890
      %v1892 = vstv %s1849
      %v1893 = vsel %vm1891, %v1892, 0.0
      %vm1894 = vcmp.eq.s32.totalorder %v1886, 1
      %vm1895 = vmand %vm1889, %vm1894
      %v1896 = vstv %s1861
      %v1897 = vsel %vm1895, %v1896, 0.0
      %v1898 = vadd.f32 %v1893, %v1897
      %vm1899 = vcmp.eq.s32.totalorder %v1886, 2
      %vm1900 = vmand %vm1889, %vm1899
      %v1901 = vstv %s1872
      %v1902 = vsel %vm1900, %v1901, 0.0
      %v1903 = vadd.f32 %v1898, %v1902
      %vm1904 = vcmp.eq.s32.totalorder %v1886, 3
      %vm1905 = vmand %vm1889, %vm1904
      %v1906 = vstv %s1884
      %v1907 = vsel %vm1905, %v1906, 0.0
      %v1908 = vadd.f32 %v1903, %v1907
      %1909 = vst [vmem:[#allocation6] sm:$0xff] %v1908
    $region41: #{tpu_custom_call.1} parent=1 // pred_fallthru
      _
    // Predicated region
    $region42: #{tpu_custom_call.1} parent=1 // pred_check
      _
    $region43: #{tpu_custom_call.1} parent=1 // pred_check_branch
      %1911 = sbr.rel (0) target = $region45
    $region44: #{tpu_custom_call.1} parent=1 // pred_region
      %s1913 = ssub.s32 128, 128
      %1914 = vsyncadd [#allocation7], %s1913
      %s1916 = sshll.u32 [#allocation6], 4
      %s1917 = int_to_ptr.vmem [resolvable:$true] %s1916
      %1919 = dma.vmem_to_hbm [thread:$0]  %s1917, 128, %s6, [#allocation7]
    $region45: #{tpu_custom_call.1} parent=1 // pred_fallthru
      _
    // Predicated region
    $region46: #{tpu_custom_call.1} parent=1 // pred_check
      _
    $region47: #{tpu_custom_call.1} parent=1 // pred_check_branch
      %1921 = sbr.rel (0) target = $region49
    $region48: #{tpu_custom_call.1} parent=1 // pred_region
      %1922 = dma.done [#allocation7], 128
    $region49: #{tpu_custom_call.1} parent=1 // pred_fallthru
      _
    %1923 = vsyncpa [#allocation7], 1

</llo_original>
